<compile_context>
chip_gen: v6e
topology: v6e:2x2x1
jax: 0.10.0
libtpu: 0.0.40
codegen_flags: <defaults>
</compile_context>

<pallas_src>
import functools

import jax
import jax.numpy as jnp
import numpy as np
from jax import lax
from jax.experimental import pallas as pl
from jax.experimental.pallas import tpu as pltpu


def _round_up(n, m):
    return ((n + m - 1) // m) * m


def _pad2(a, rows, cols):
    r, c = a.shape
    return jnp.pad(a, ((0, rows - r), (0, cols - c)))


# ----------------------------- Pallas kernel --------------------------------
def lstm_head_kernel(x_ref, wih0_ref, whh0_ref, b0_ref,
                     wihR_hbm, whhR_hbm, bR_ref,
                     w1_ref, b1_ref, w2_ref, b2_ref,
                     out_ref,
                     wihR_vmem, whhR_vmem, dma_sem,
                     *, T, Bp, H, n_extra):
    """Multi-layer LSTM recurrence + fc1 -> relu -> fc2 head, all in VMEM.

    x_ref:   (T*Bp, D_in)      time-major, batch sublane-padded to Bp=8
    wih0:    (D_in, 4H)        dense gate slab, order (i, f, o, g)
    whh0:    (H, 4H), b0: (1, 4H)
    wihR/whhR (HBM): (n_extra, H, 4H)   layers 1..L-1, DMA'd to VMEM scratch
    bR:      (n_extra, 1, 4H)
    w1: (H, H2), b1: (1, H2), w2: (H2, Op), b2: (1, Op)
    out_ref: (Bp, Op)          lane-dense padded output (sliced in wrapper)
    """
    f32 = jnp.float32
    G = 4 * H

    # Overlap the upper-layer weight DMA (HBM -> VMEM scratch) with the layer-0
    # recurrence; wait only right before those weights are actually needed.
    if n_extra > 0:
        cp_wih = pltpu.make_async_copy(wihR_hbm, wihR_vmem, dma_sem.at[0])
        cp_whh = pltpu.make_async_copy(whhR_hbm, whhR_vmem, dma_sem.at[1])
        cp_wih.start()
        cp_whh.start()

    # Lane mask selecting the tanh gate (g), which is packed LAST: lanes [3H, 4H).
    # Computed once (hoisted) -- broadcast is not CSE'd by JAX.
    g_mask = lax.broadcasted_iota(jnp.int32, (Bp, G), 1) >= 3 * H

    def recurrence(gx, whh, collect_seq):
        # gx: (T*Bp, 4H) precomputed x-projection + bias (hoisted off the serial
        # critical path). Only the h @ W_hh matmul remains per step.
        h = jnp.zeros((Bp, H), f32)
        c = jnp.zeros((Bp, H), f32)
        hs = []
        for t in range(T):  # static unroll: T is a small compile-time constant
            gates = gx[t * Bp:(t + 1) * Bp, :] + jnp.dot(
                h, whh, preferred_element_type=f32)               # (Bp, 4H)
            # one sigmoid + one tanh per step on the full gate vreg (EUP),
            # selected per-lane (tanh only on the g slab).
            act = jnp.where(g_mask, jnp.tanh(gates), jax.nn.sigmoid(gates))
            i = act[:, 0 * H:1 * H]
            f = act[:, 1 * H:2 * H]
            o = act[:, 2 * H:3 * H]
            g = act[:, 3 * H:4 * H]
            c = f * c + i * g
            h = o * jnp.tanh(c)
            if collect_seq:
                hs.append(h)
        seq = jnp.concatenate(hs, axis=0) if collect_seq else None
        return h, seq

    # ----- layer 0: x-projection for ALL timesteps in one MXU matmul -----
    gx = jnp.dot(x_ref[...], wih0_ref[...],
                 preferred_element_type=f32) + b0_ref[...]        # (T*Bp, 4H)
    h_last, seq = recurrence(gx, whh0_ref[...], collect_seq=(n_extra > 0))

    # ----- layers 1..L-1 (static Python unroll, static weight indexing) -----
    # TODO(synk): nn.LSTM inter-layer dropout (training mode only) is not
    # modeled; this matches PyTorch eval-mode forward semantics.
    if n_extra > 0:
        cp_wih.wait()
        cp_whh.wait()
    for l in range(n_extra):
        gx = jnp.dot(seq, wihR_vmem[l],
                     preferred_element_type=f32) + bR_ref[l]      # (T*Bp, 4H)
        # last layer never materializes its output sequence (head only needs h_T-1)
        h_last, seq = recurrence(gx, whhR_vmem[l], collect_seq=(l < n_extra - 1))

    # ----- head: fc1 -> relu -> fc2 (fc2 output padded to a lane-dense vreg) -----
    z1 = jnp.maximum(
        jnp.dot(h_last, w1_ref[...], preferred_element_type=f32) + b1_ref[...], 0.0)
    out_ref[...] = (jnp.dot(z1, w2_ref[...], preferred_element_type=f32)
                    + b2_ref[...])


# ----------------------- One-time parameter packing --------------------------
def pack_params(params, *, hidden_size, num_layers, num_outputs):
    """Pack/transpose/pad weights ONCE; cache the result and reuse per call."""
    H = hidden_size
    H2 = H // 2
    OP = _round_up(num_outputs, 128)
    # PyTorch row-block order is (i, f, g, o); we pack densely as (i, f, o, g)
    # so the single tanh gate sits in the last lane slab.
    GATE_ORDER = (0, 1, 3, 2)

    def pack_w(w):  # (4H, in_dim) -> (in_dim, 4H), dense, order (i, f, o, g)
        return jnp.concatenate(
            [w[g * H:(g + 1) * H, :].T for g in GATE_ORDER], axis=1
        ).astype(jnp.float32)

    def pack_b(b_ih, b_hh):
        b = (b_ih + b_hh).astype(jnp.float32)
        return jnp.concatenate([b[g * H:(g + 1) * H] for g in GATE_ORDER])[None, :]

    packed = {
        "day_emb": params["day_emb"].astype(jnp.float32),
        "month_emb": params["month_emb"].astype(jnp.float32),
        "hour_emb": params["hour_emb"].astype(jnp.float32),
        "minute_emb": params["minute_emb"].astype(jnp.float32),
        "wih0": pack_w(params["w_ih_0"]),                          # (D_in, 4H)
        "whh0": pack_w(params["w_hh_0"]),                          # (H, 4H)
        "b0": pack_b(params["b_ih_0"], params["b_hh_0"]),          # (1, 4H)
        "w1": params["fc1_w"].T.astype(jnp.float32),               # (H, H2)
        "b1": params["fc1_b"].reshape(1, -1).astype(jnp.float32),  # (1, H2)
        "w2": _pad2(params["fc2_w"].T.astype(jnp.float32), H2, OP),   # (H2, OP)
        "b2": _pad2(params["fc2_b"].reshape(1, -1).astype(jnp.float32), 1, OP),
    }

    n_extra = num_layers - 1
    if n_extra > 0:
        packed["wih_rest"] = jnp.stack(
            [pack_w(params[f"w_ih_{l}"]) for l in range(1, num_layers)])   # (L-1, H, 4H)
        packed["whh_rest"] = jnp.stack(
            [pack_w(params[f"w_hh_{l}"]) for l in range(1, num_layers)])   # (L-1, H, 4H)
        packed["b_rest"] = jnp.stack(
            [pack_b(params[f"b_ih_{l}"], params[f"b_hh_{l}"])
             for l in range(1, num_layers)])                               # (L-1, 1, 4H)
    else:  # unused dummies so the kernel signature stays fixed
        packed["wih_rest"] = jnp.zeros((1, H, 4 * H), jnp.float32)
        packed["whh_rest"] = jnp.zeros((1, H, 4 * H), jnp.float32)
        packed["b_rest"] = jnp.zeros((1, 1, 4 * H), jnp.float32)
    return jax.tree_util.tree_map(jnp.asarray, packed)


# ----------------------------- Forward wrapper -------------------------------
def lstm_forward(x_idx, y, packed, *, hidden_size, num_layers, num_outputs):
    B, T, _ = x_idx.shape
    H = hidden_size
    H2 = H // 2
    Bp = _round_up(B, 8)                 # sublane-align the per-timestep slices
    OP = packed["w2"].shape[1]
    n_extra = num_layers - 1
    n_alloc = max(n_extra, 1)

    # ---- embedding lookups + concat (glue, plain JAX) ----
    d = jnp.take(packed["day_emb"], x_idx[:, :, 0], axis=0)
    m = jnp.take(packed["month_emb"], x_idx[:, :, 1], axis=0)
    hr = jnp.take(packed["hour_emb"], x_idx[:, :, 2], axis=0)
    mi = jnp.take(packed["minute_emb"], x_idx[:, :, 3], axis=0)
    feats = jnp.concatenate([d, m, hr, mi, y[..., None]], axis=-1).astype(jnp.float32)
    D_in = feats.shape[-1]

    # ---- time-major flattened input, batch zero-padded to Bp (8-row tiles) ----
    feats = jnp.pad(feats, ((0, Bp - B), (0, 0), (0, 0)))          # (Bp, T, D_in)
    x_seq = jnp.transpose(feats, (1, 0, 2)).reshape(T * Bp, D_in)  # (T*Bp, D_in)

    vmem = pl.BlockSpec(memory_space=pltpu.MemorySpace.VMEM)
    any_spec = pl.BlockSpec(memory_space=pl.ANY)   # raw HBM ref, manual DMA overlap
    kernel = functools.partial(lstm_head_kernel, T=T, Bp=Bp, H=H, n_extra=n_extra)

    args = (x_seq, packed["wih0"], packed["whh0"], packed["b0"],
            packed["wih_rest"], packed["whh_rest"], packed["b_rest"],
            packed["w1"], packed["b1"], packed["w2"], packed["b2"])

    # ---- cost estimate with real (unpadded) dims ----
    flops = (2 * T * Bp * D_in * 4 * H                 # layer-0 x-projection
             + n_extra * 2 * T * Bp * H * 4 * H        # upper-layer x-projections
             + num_layers * T * 2 * Bp * H * 4 * H     # recurrent h-projections
             + 2 * Bp * H * H2 + 2 * Bp * H2 * OP)     # head
    transcendentals = num_layers * T * Bp * (2 * 4 * H + H)
    bytes_accessed = int(sum(int(np.prod(a.shape)) * a.dtype.itemsize for a in args)
                         + Bp * OP * 4)

    out_p = pl.pallas_call(
        kernel,
        out_shape=jax.ShapeDtypeStruct((Bp, OP), jnp.float32),
        in_specs=[vmem, vmem, vmem, vmem,          # x_seq, layer-0 weights/bias
                  any_spec, any_spec,              # upper-layer weights stay in HBM
                  vmem,                            # upper-layer biases (tiny)
                  vmem, vmem, vmem, vmem],         # head
        out_specs=vmem,
        scratch_shapes=[
            pltpu.VMEM((n_alloc, H, 4 * H), jnp.float32),   # wih_rest landing buffer
            pltpu.VMEM((n_alloc, H, 4 * H), jnp.float32),   # whh_rest landing buffer
            pltpu.SemaphoreType.DMA((2,)),
        ],
        cost_estimate=pl.CostEstimate(flops=int(flops),
                                      transcendentals=int(transcendentals),
                                      bytes_accessed=bytes_accessed),
    )(*args)
    return out_p[:B, :num_outputs]


# ----------------------------- Pure-JAX reference ----------------------------
def ref_forward(x_idx, y, params, *, hidden_size, num_layers, num_outputs):
    B, T, _ = x_idx.shape
    H = hidden_size
    hi = lax.Precision.HIGHEST
    d = jnp.take(params["day_emb"], x_idx[:, :, 0], axis=0)
    m = jnp.take(params["month_emb"], x_idx[:, :, 1], axis=0)
    h = jnp.take(params["hour_emb"], x_idx[:, :, 2], axis=0)
    mi = jnp.take(params["minute_emb"], x_idx[:, :, 3], axis=0)
    seq = jnp.concatenate([d, m, h, mi, y[..., None]], axis=-1)

    layer_in = seq
    for l in range(num_layers):
        wih = params[f"w_ih_{l}"]
        whh = params[f"w_hh_{l}"]
        b = params[f"b_ih_{l}"] + params[f"b_hh_{l}"]

        def step(carry, x_t):
            hh, cc = carry
            gates = (jnp.dot(x_t, wih.T, precision=hi)
                     + jnp.dot(hh, whh.T, precision=hi) + b)
            i, f, g, o = jnp.split(gates, 4, axis=-1)
            i, f, o = jax.nn.sigmoid(i), jax.nn.sigmoid(f), jax.nn.sigmoid(o)
            g = jnp.tanh(g)
            cc = f * cc + i * g
            hh = o * jnp.tanh(cc)
            return (hh, cc), hh

        init = (jnp.zeros((B, H), jnp.float32), jnp.zeros((B, H), jnp.float32))
        _, ys = lax.scan(step, init, jnp.transpose(layer_in, (1, 0, 2)))
        layer_in = jnp.transpose(ys, (1, 0, 2))

    last = layer_in[:, -1, :]
    z = jnp.maximum(jnp.dot(last, params["fc1_w"].T, precision=hi) + params["fc1_b"], 0.0)
    return jnp.dot(z, params["fc2_w"].T, precision=hi) + params["fc2_b"]


# ----------------------------- Main -------------------------------------------
if __name__ == "__main__":
    # module hyperparameters (small, consistent with the forward pass)
    emb_sizes = [(31, 8), (12, 8), (24, 8), (60, 7)]    # num_embeddings, emb_dim
    lstm_input_size = sum(e[1] for e in emb_sizes) + 1  # = 32
    lstm_hidden_size = 32
    lstm_num_layers = 2
    num_outputs = 4
    B, T = 2, 8

    key = jax.random.PRNGKey(0)
    keys = jax.random.split(key, 32)
    ki = iter(keys)
    k = 1.0 / np.sqrt(lstm_hidden_size)

    def uni(rng, shape, scale=k):
        return jax.random.uniform(rng, shape, jnp.float32, minval=-scale, maxval=scale)

    params = {
        "day_emb": jax.random.normal(next(ki), (emb_sizes[0][0], emb_sizes[0][1]), jnp.float32),
        "month_emb": jax.random.normal(next(ki), (emb_sizes[1][0], emb_sizes[1][1]), jnp.float32),
        "hour_emb": jax.random.normal(next(ki), (emb_sizes[2][0], emb_sizes[2][1]), jnp.float32),
        "minute_emb": jax.random.normal(next(ki), (emb_sizes[3][0], emb_sizes[3][1]), jnp.float32),
    }
    H, H2 = lstm_hidden_size, lstm_hidden_size // 2
    for l in range(lstm_num_layers):
        d_in = lstm_input_size if l == 0 else H
        params[f"w_ih_{l}"] = uni(next(ki), (4 * H, d_in))
        params[f"w_hh_{l}"] = uni(next(ki), (4 * H, H))
        params[f"b_ih_{l}"] = uni(next(ki), (4 * H,))
        params[f"b_hh_{l}"] = uni(next(ki), (4 * H,))
    params["fc1_w"] = uni(next(ki), (H2, H), 1.0 / np.sqrt(H))
    params["fc1_b"] = uni(next(ki), (H2,), 1.0 / np.sqrt(H))
    params["fc2_w"] = uni(next(ki), (num_outputs, H2), 1.0 / np.sqrt(H2))
    params["fc2_b"] = uni(next(ki), (num_outputs,), 1.0 / np.sqrt(H2))

    # deterministic example inputs
    kx1, kx2, kx3, kx4, ky = jax.random.split(jax.random.PRNGKey(0), 5)
    x_idx = jnp.stack([
        jax.random.randint(kx1, (B, T), 0, emb_sizes[0][0]),
        jax.random.randint(kx2, (B, T), 0, emb_sizes[1][0]),
        jax.random.randint(kx3, (B, T), 0, emb_sizes[2][0]),
        jax.random.randint(kx4, (B, T), 0, emb_sizes[3][0]),
    ], axis=-1).astype(jnp.int32)                                   # (B, T, 4)
    y = jax.random.normal(ky, (B, T), jnp.float32)                  # (B, T)

    # one-time weight packing (cached); the per-call wrapper does no packing
    packed = jax.block_until_ready(
        pack_params(params, hidden_size=lstm_hidden_size,
                    num_layers=lstm_num_layers, num_outputs=num_outputs))

    run = jax.jit(functools.partial(lstm_forward,
                                    hidden_size=lstm_hidden_size,
                                    num_layers=lstm_num_layers,
                                    num_outputs=num_outputs))
    out = jax.block_until_ready(run(x_idx, y, packed))

    ref = jax.block_until_ready(ref_forward(
        x_idx, y, params,
        hidden_size=lstm_hidden_size,
        num_layers=lstm_num_layers,
        num_outputs=num_outputs))

    assert out.shape == (B, num_outputs)
    np.testing.assert_allclose(np.asarray(out), np.asarray(ref), rtol=1e-3, atol=1e-3)
    print("KERNEL_OK")
</pallas_src>

<mosaic_0001>
module attributes {stable_mosaic.version = 11 : i64} {
  func.func @lstm_head_kernel(%arg0: memref<64x32xf32, #tpu.memory_space<vmem>>, %arg1: memref<32x128xf32, #tpu.memory_space<vmem>>, %arg2: memref<32x128xf32, #tpu.memory_space<vmem>>, %arg3: memref<1x128xf32, #tpu.memory_space<vmem>>, %arg4: memref<1x32x128xf32, #tpu.memory_space<any>>, %arg5: memref<1x32x128xf32, #tpu.memory_space<any>>, %arg6: memref<1x1x128xf32, #tpu.memory_space<vmem>>, %arg7: memref<32x16xf32, #tpu.memory_space<vmem>>, %arg8: memref<1x16xf32, #tpu.memory_space<vmem>>, %arg9: memref<16x128xf32, #tpu.memory_space<vmem>>, %arg10: memref<1x128xf32, #tpu.memory_space<vmem>>, %arg11: memref<8x128xf32, #tpu.memory_space<vmem>>, %arg12: memref<1x32x128xf32, #tpu.memory_space<vmem>>, %arg13: memref<1x32x128xf32, #tpu.memory_space<vmem>>, %arg14: memref<2x!tpu.dma_semaphore, #tpu.memory_space<semaphore_mem>>) attributes {dimension_semantics = [], scalar_prefetch = 0 : i64, scratch_operands = 3 : i64, tpu.core_type = #tpu.core_type<tc>} {
    %c0_i32 = arith.constant 0 : i32
    %0 = tpu.memref_slice %arg14[%c0_i32] : memref<2x!tpu.dma_semaphore, #tpu.memory_space<semaphore_mem>> -> memref<1x!tpu.dma_semaphore, #tpu.memory_space<semaphore_mem>>
    %1 = tpu.memref_squeeze %0 : memref<1x!tpu.dma_semaphore, #tpu.memory_space<semaphore_mem>> -> memref<!tpu.dma_semaphore, #tpu.memory_space<semaphore_mem>>
    tpu.enqueue_dma source(%arg4 : memref<1x32x128xf32, #tpu.memory_space<any>>) target(%arg12 : memref<1x32x128xf32, #tpu.memory_space<vmem>>) target_semaphore(%1 : memref<!tpu.dma_semaphore, #tpu.memory_space<semaphore_mem>>)
    %c1_i32 = arith.constant 1 : i32
    %2 = tpu.memref_slice %arg14[%c1_i32] : memref<2x!tpu.dma_semaphore, #tpu.memory_space<semaphore_mem>> -> memref<1x!tpu.dma_semaphore, #tpu.memory_space<semaphore_mem>>
    %3 = tpu.memref_squeeze %2 : memref<1x!tpu.dma_semaphore, #tpu.memory_space<semaphore_mem>> -> memref<!tpu.dma_semaphore, #tpu.memory_space<semaphore_mem>>
    tpu.enqueue_dma source(%arg5 : memref<1x32x128xf32, #tpu.memory_space<any>>) target(%arg13 : memref<1x32x128xf32, #tpu.memory_space<vmem>>) target_semaphore(%3 : memref<!tpu.dma_semaphore, #tpu.memory_space<semaphore_mem>>)
    %4 = tpu.iota {dimensions = array<i32: 1>} : vector<8x128xi32>
    %c96_i32 = arith.constant 96 : i32
    %5 = vector.broadcast %c96_i32 : i32 to vector<8x128xi32>
    %6 = arith.cmpi sge, %4, %5 : vector<8x128xi32>
    %c0 = arith.constant 0 : index
    %c0_0 = arith.constant 0 : index
    %7 = vector.load %arg0[%c0, %c0_0] : memref<64x32xf32, #tpu.memory_space<vmem>>, vector<64x32xf32>
    %c0_1 = arith.constant 0 : index
    %c0_2 = arith.constant 0 : index
    %8 = vector.load %arg1[%c0_1, %c0_2] : memref<32x128xf32, #tpu.memory_space<vmem>>, vector<32x128xf32>
    %cst = arith.constant dense<0.000000e+00> : vector<64x128xf32>
    %9 = tpu.matmul %7, %8, %cst {dimension_numbers = #tpu.dot_dimension_numbers<[1], [0], [0], [1], [0, 0, 1, 1], [], []>} : vector<64x32xf32>, vector<32x128xf32>, vector<64x128xf32> -> vector<64x128xf32>
    %c0_3 = arith.constant 0 : index
    %c0_4 = arith.constant 0 : index
    %10 = vector.load %arg3[%c0_3, %c0_4] : memref<1x128xf32, #tpu.memory_space<vmem>>, vector<1x128xf32>
    %11 = vector.broadcast %10 : vector<1x128xf32> to vector<64x128xf32>
    %12 = arith.addf %9, %11 : vector<64x128xf32>
    %c0_5 = arith.constant 0 : index
    %c0_6 = arith.constant 0 : index
    %13 = vector.load %arg2[%c0_5, %c0_6] : memref<32x128xf32, #tpu.memory_space<vmem>>, vector<32x128xf32>
    %cst_7 = arith.constant 0.000000e+00 : f32
    %14 = vector.broadcast %cst_7 : f32 to vector<8x32xf32>
    %cst_8 = arith.constant 0.000000e+00 : f32
    %15 = vector.broadcast %cst_8 : f32 to vector<8x32xf32>
    %16 = vector.extract_strided_slice %12 {offsets = [0, 0], sizes = [8, 128], strides = [1, 1]} : vector<64x128xf32> to vector<8x128xf32>
    %cst_9 = arith.constant dense<0.000000e+00> : vector<8x128xf32>
    %17 = tpu.matmul %14, %13, %cst_9 {dimension_numbers = #tpu.dot_dimension_numbers<[1], [0], [0], [1], [0, 0, 1, 1], [], []>} : vector<8x32xf32>, vector<32x128xf32>, vector<8x128xf32> -> vector<8x128xf32>
    %18 = arith.addf %16, %17 : vector<8x128xf32>
    %19 = math.tanh %18 : vector<8x128xf32>
    %20 = arith.negf %18 : vector<8x128xf32>
    %21 = math.exp %20 : vector<8x128xf32>
    %cst_10 = arith.constant 1.000000e+00 : f32
    %22 = vector.broadcast %cst_10 : f32 to vector<8x128xf32>
    %23 = arith.addf %22, %21 : vector<8x128xf32>
    %24 = arith.divf %22, %23 : vector<8x128xf32>
    %25 = arith.select %6, %19, %24 : vector<8x128xi1>, vector<8x128xf32>
    %26 = vector.extract_strided_slice %25 {offsets = [0, 0], sizes = [8, 32], strides = [1, 1]} : vector<8x128xf32> to vector<8x32xf32>
    %27 = vector.extract_strided_slice %25 {offsets = [0, 32], sizes = [8, 32], strides = [1, 1]} : vector<8x128xf32> to vector<8x32xf32>
    %28 = vector.extract_strided_slice %25 {offsets = [0, 64], sizes = [8, 32], strides = [1, 1]} : vector<8x128xf32> to vector<8x32xf32>
    %29 = vector.extract_strided_slice %25 {offsets = [0, 96], sizes = [8, 32], strides = [1, 1]} : vector<8x128xf32> to vector<8x32xf32>
    %30 = arith.mulf %27, %15 : vector<8x32xf32>
    %31 = arith.mulf %26, %29 : vector<8x32xf32>
    %32 = arith.addf %30, %31 : vector<8x32xf32>
    %33 = math.tanh %32 : vector<8x32xf32>
    %34 = arith.mulf %28, %33 : vector<8x32xf32>
    %35 = vector.extract_strided_slice %12 {offsets = [8, 0], sizes = [8, 128], strides = [1, 1]} : vector<64x128xf32> to vector<8x128xf32>
    %cst_11 = arith.constant dense<0.000000e+00> : vector<8x128xf32>
    %36 = tpu.matmul %34, %13, %cst_11 {dimension_numbers = #tpu.dot_dimension_numbers<[1], [0], [0], [1], [0, 0, 1, 1], [], []>} : vector<8x32xf32>, vector<32x128xf32>, vector<8x128xf32> -> vector<8x128xf32>
    %37 = arith.addf %35, %36 : vector<8x128xf32>
    %38 = math.tanh %37 : vector<8x128xf32>
    %39 = arith.negf %37 : vector<8x128xf32>
    %40 = math.exp %39 : vector<8x128xf32>
    %cst_12 = arith.constant 1.000000e+00 : f32
    %41 = vector.broadcast %cst_12 : f32 to vector<8x128xf32>
    %42 = arith.addf %41, %40 : vector<8x128xf32>
    %43 = arith.divf %41, %42 : vector<8x128xf32>
    %44 = arith.select %6, %38, %43 : vector<8x128xi1>, vector<8x128xf32>
    %45 = vector.extract_strided_slice %44 {offsets = [0, 0], sizes = [8, 32], strides = [1, 1]} : vector<8x128xf32> to vector<8x32xf32>
    %46 = vector.extract_strided_slice %44 {offsets = [0, 32], sizes = [8, 32], strides = [1, 1]} : vector<8x128xf32> to vector<8x32xf32>
    %47 = vector.extract_strided_slice %44 {offsets = [0, 64], sizes = [8, 32], strides = [1, 1]} : vector<8x128xf32> to vector<8x32xf32>
    %48 = vector.extract_strided_slice %44 {offsets = [0, 96], sizes = [8, 32], strides = [1, 1]} : vector<8x128xf32> to vector<8x32xf32>
    %49 = arith.mulf %46, %32 : vector<8x32xf32>
    %50 = arith.mulf %45, %48 : vector<8x32xf32>
    %51 = arith.addf %49, %50 : vector<8x32xf32>
    %52 = math.tanh %51 : vector<8x32xf32>
    %53 = arith.mulf %47, %52 : vector<8x32xf32>
    %54 = vector.extract_strided_slice %12 {offsets = [16, 0], sizes = [8, 128], strides = [1, 1]} : vector<64x128xf32> to vector<8x128xf32>
    %cst_13 = arith.constant dense<0.000000e+00> : vector<8x128xf32>
    %55 = tpu.matmul %53, %13, %cst_13 {dimension_numbers = #tpu.dot_dimension_numbers<[1], [0], [0], [1], [0, 0, 1, 1], [], []>} : vector<8x32xf32>, vector<32x128xf32>, vector<8x128xf32> -> vector<8x128xf32>
    %56 = arith.addf %54, %55 : vector<8x128xf32>
    %57 = math.tanh %56 : vector<8x128xf32>
    %58 = arith.negf %56 : vector<8x128xf32>
    %59 = math.exp %58 : vector<8x128xf32>
    %cst_14 = arith.constant 1.000000e+00 : f32
    %60 = vector.broadcast %cst_14 : f32 to vector<8x128xf32>
    %61 = arith.addf %60, %59 : vector<8x128xf32>
    %62 = arith.divf %60, %61 : vector<8x128xf32>
    %63 = arith.select %6, %57, %62 : vector<8x128xi1>, vector<8x128xf32>
    %64 = vector.extract_strided_slice %63 {offsets = [0, 0], sizes = [8, 32], strides = [1, 1]} : vector<8x128xf32> to vector<8x32xf32>
    %65 = vector.extract_strided_slice %63 {offsets = [0, 32], sizes = [8, 32], strides = [1, 1]} : vector<8x128xf32> to vector<8x32xf32>
    %66 = vector.extract_strided_slice %63 {offsets = [0, 64], sizes = [8, 32], strides = [1, 1]} : vector<8x128xf32> to vector<8x32xf32>
    %67 = vector.extract_strided_slice %63 {offsets = [0, 96], sizes = [8, 32], strides = [1, 1]} : vector<8x128xf32> to vector<8x32xf32>
    %68 = arith.mulf %65, %51 : vector<8x32xf32>
    %69 = arith.mulf %64, %67 : vector<8x32xf32>
    %70 = arith.addf %68, %69 : vector<8x32xf32>
    %71 = math.tanh %70 : vector<8x32xf32>
    %72 = arith.mulf %66, %71 : vector<8x32xf32>
    %73 = vector.extract_strided_slice %12 {offsets = [24, 0], sizes = [8, 128], strides = [1, 1]} : vector<64x128xf32> to vector<8x128xf32>
    %cst_15 = arith.constant dense<0.000000e+00> : vector<8x128xf32>
    %74 = tpu.matmul %72, %13, %cst_15 {dimension_numbers = #tpu.dot_dimension_numbers<[1], [0], [0], [1], [0, 0, 1, 1], [], []>} : vector<8x32xf32>, vector<32x128xf32>, vector<8x128xf32> -> vector<8x128xf32>
    %75 = arith.addf %73, %74 : vector<8x128xf32>
    %76 = math.tanh %75 : vector<8x128xf32>
    %77 = arith.negf %75 : vector<8x128xf32>
    %78 = math.exp %77 : vector<8x128xf32>
    %cst_16 = arith.constant 1.000000e+00 : f32
    %79 = vector.broadcast %cst_16 : f32 to vector<8x128xf32>
    %80 = arith.addf %79, %78 : vector<8x128xf32>
    %81 = arith.divf %79, %80 : vector<8x128xf32>
    %82 = arith.select %6, %76, %81 : vector<8x128xi1>, vector<8x128xf32>
    %83 = vector.extract_strided_slice %82 {offsets = [0, 0], sizes = [8, 32], strides = [1, 1]} : vector<8x128xf32> to vector<8x32xf32>
    %84 = vector.extract_strided_slice %82 {offsets = [0, 32], sizes = [8, 32], strides = [1, 1]} : vector<8x128xf32> to vector<8x32xf32>
    %85 = vector.extract_strided_slice %82 {offsets = [0, 64], sizes = [8, 32], strides = [1, 1]} : vector<8x128xf32> to vector<8x32xf32>
    %86 = vector.extract_strided_slice %82 {offsets = [0, 96], sizes = [8, 32], strides = [1, 1]} : vector<8x128xf32> to vector<8x32xf32>
    %87 = arith.mulf %84, %70 : vector<8x32xf32>
    %88 = arith.mulf %83, %86 : vector<8x32xf32>
    %89 = arith.addf %87, %88 : vector<8x32xf32>
    %90 = math.tanh %89 : vector<8x32xf32>
    %91 = arith.mulf %85, %90 : vector<8x32xf32>
    %92 = vector.extract_strided_slice %12 {offsets = [32, 0], sizes = [8, 128], strides = [1, 1]} : vector<64x128xf32> to vector<8x128xf32>
    %cst_17 = arith.constant dense<0.000000e+00> : vector<8x128xf32>
    %93 = tpu.matmul %91, %13, %cst_17 {dimension_numbers = #tpu.dot_dimension_numbers<[1], [0], [0], [1], [0, 0, 1, 1], [], []>} : vector<8x32xf32>, vector<32x128xf32>, vector<8x128xf32> -> vector<8x128xf32>
    %94 = arith.addf %92, %93 : vector<8x128xf32>
    %95 = math.tanh %94 : vector<8x128xf32>
    %96 = arith.negf %94 : vector<8x128xf32>
    %97 = math.exp %96 : vector<8x128xf32>
    %cst_18 = arith.constant 1.000000e+00 : f32
    %98 = vector.broadcast %cst_18 : f32 to vector<8x128xf32>
    %99 = arith.addf %98, %97 : vector<8x128xf32>
    %100 = arith.divf %98, %99 : vector<8x128xf32>
    %101 = arith.select %6, %95, %100 : vector<8x128xi1>, vector<8x128xf32>
    %102 = vector.extract_strided_slice %101 {offsets = [0, 0], sizes = [8, 32], strides = [1, 1]} : vector<8x128xf32> to vector<8x32xf32>
    %103 = vector.extract_strided_slice %101 {offsets = [0, 32], sizes = [8, 32], strides = [1, 1]} : vector<8x128xf32> to vector<8x32xf32>
    %104 = vector.extract_strided_slice %101 {offsets = [0, 64], sizes = [8, 32], strides = [1, 1]} : vector<8x128xf32> to vector<8x32xf32>
    %105 = vector.extract_strided_slice %101 {offsets = [0, 96], sizes = [8, 32], strides = [1, 1]} : vector<8x128xf32> to vector<8x32xf32>
    %106 = arith.mulf %103, %89 : vector<8x32xf32>
    %107 = arith.mulf %102, %105 : vector<8x32xf32>
    %108 = arith.addf %106, %107 : vector<8x32xf32>
    %109 = math.tanh %108 : vector<8x32xf32>
    %110 = arith.mulf %104, %109 : vector<8x32xf32>
    %111 = vector.extract_strided_slice %12 {offsets = [40, 0], sizes = [8, 128], strides = [1, 1]} : vector<64x128xf32> to vector<8x128xf32>
    %cst_19 = arith.constant dense<0.000000e+00> : vector<8x128xf32>
    %112 = tpu.matmul %110, %13, %cst_19 {dimension_numbers = #tpu.dot_dimension_numbers<[1], [0], [0], [1], [0, 0, 1, 1], [], []>} : vector<8x32xf32>, vector<32x128xf32>, vector<8x128xf32> -> vector<8x128xf32>
    %113 = arith.addf %111, %112 : vector<8x128xf32>
    %114 = math.tanh %113 : vector<8x128xf32>
    %115 = arith.negf %113 : vector<8x128xf32>
    %116 = math.exp %115 : vector<8x128xf32>
    %cst_20 = arith.constant 1.000000e+00 : f32
    %117 = vector.broadcast %cst_20 : f32 to vector<8x128xf32>
    %118 = arith.addf %117, %116 : vector<8x128xf32>
    %119 = arith.divf %117, %118 : vector<8x128xf32>
    %120 = arith.select %6, %114, %119 : vector<8x128xi1>, vector<8x128xf32>
    %121 = vector.extract_strided_slice %120 {offsets = [0, 0], sizes = [8, 32], strides = [1, 1]} : vector<8x128xf32> to vector<8x32xf32>
    %122 = vector.extract_strided_slice %120 {offsets = [0, 32], sizes = [8, 32], strides = [1, 1]} : vector<8x128xf32> to vector<8x32xf32>
    %123 = vector.extract_strided_slice %120 {offsets = [0, 64], sizes = [8, 32], strides = [1, 1]} : vector<8x128xf32> to vector<8x32xf32>
    %124 = vector.extract_strided_slice %120 {offsets = [0, 96], sizes = [8, 32], strides = [1, 1]} : vector<8x128xf32> to vector<8x32xf32>
    %125 = arith.mulf %122, %108 : vector<8x32xf32>
    %126 = arith.mulf %121, %124 : vector<8x32xf32>
    %127 = arith.addf %125, %126 : vector<8x32xf32>
    %128 = math.tanh %127 : vector<8x32xf32>
    %129 = arith.mulf %123, %128 : vector<8x32xf32>
    %130 = vector.extract_strided_slice %12 {offsets = [48, 0], sizes = [8, 128], strides = [1, 1]} : vector<64x128xf32> to vector<8x128xf32>
    %cst_21 = arith.constant dense<0.000000e+00> : vector<8x128xf32>
    %131 = tpu.matmul %129, %13, %cst_21 {dimension_numbers = #tpu.dot_dimension_numbers<[1], [0], [0], [1], [0, 0, 1, 1], [], []>} : vector<8x32xf32>, vector<32x128xf32>, vector<8x128xf32> -> vector<8x128xf32>
    %132 = arith.addf %130, %131 : vector<8x128xf32>
    %133 = math.tanh %132 : vector<8x128xf32>
    %134 = arith.negf %132 : vector<8x128xf32>
    %135 = math.exp %134 : vector<8x128xf32>
    %cst_22 = arith.constant 1.000000e+00 : f32
    %136 = vector.broadcast %cst_22 : f32 to vector<8x128xf32>
    %137 = arith.addf %136, %135 : vector<8x128xf32>
    %138 = arith.divf %136, %137 : vector<8x128xf32>
    %139 = arith.select %6, %133, %138 : vector<8x128xi1>, vector<8x128xf32>
    %140 = vector.extract_strided_slice %139 {offsets = [0, 0], sizes = [8, 32], strides = [1, 1]} : vector<8x128xf32> to vector<8x32xf32>
    %141 = vector.extract_strided_slice %139 {offsets = [0, 32], sizes = [8, 32], strides = [1, 1]} : vector<8x128xf32> to vector<8x32xf32>
    %142 = vector.extract_strided_slice %139 {offsets = [0, 64], sizes = [8, 32], strides = [1, 1]} : vector<8x128xf32> to vector<8x32xf32>
    %143 = vector.extract_strided_slice %139 {offsets = [0, 96], sizes = [8, 32], strides = [1, 1]} : vector<8x128xf32> to vector<8x32xf32>
    %144 = arith.mulf %141, %127 : vector<8x32xf32>
    %145 = arith.mulf %140, %143 : vector<8x32xf32>
    %146 = arith.addf %144, %145 : vector<8x32xf32>
    %147 = math.tanh %146 : vector<8x32xf32>
    %148 = arith.mulf %142, %147 : vector<8x32xf32>
    %149 = vector.extract_strided_slice %12 {offsets = [56, 0], sizes = [8, 128], strides = [1, 1]} : vector<64x128xf32> to vector<8x128xf32>
    %cst_23 = arith.constant dense<0.000000e+00> : vector<8x128xf32>
    %150 = tpu.matmul %148, %13, %cst_23 {dimension_numbers = #tpu.dot_dimension_numbers<[1], [0], [0], [1], [0, 0, 1, 1], [], []>} : vector<8x32xf32>, vector<32x128xf32>, vector<8x128xf32> -> vector<8x128xf32>
    %151 = arith.addf %149, %150 : vector<8x128xf32>
    %152 = math.tanh %151 : vector<8x128xf32>
    %153 = arith.negf %151 : vector<8x128xf32>
    %154 = math.exp %153 : vector<8x128xf32>
    %cst_24 = arith.constant 1.000000e+00 : f32
    %155 = vector.broadcast %cst_24 : f32 to vector<8x128xf32>
    %156 = arith.addf %155, %154 : vector<8x128xf32>
    %157 = arith.divf %155, %156 : vector<8x128xf32>
    %158 = arith.select %6, %152, %157 : vector<8x128xi1>, vector<8x128xf32>
    %159 = vector.extract_strided_slice %158 {offsets = [0, 0], sizes = [8, 32], strides = [1, 1]} : vector<8x128xf32> to vector<8x32xf32>
    %160 = vector.extract_strided_slice %158 {offsets = [0, 32], sizes = [8, 32], strides = [1, 1]} : vector<8x128xf32> to vector<8x32xf32>
    %161 = vector.extract_strided_slice %158 {offsets = [0, 64], sizes = [8, 32], strides = [1, 1]} : vector<8x128xf32> to vector<8x32xf32>
    %162 = vector.extract_strided_slice %158 {offsets = [0, 96], sizes = [8, 32], strides = [1, 1]} : vector<8x128xf32> to vector<8x32xf32>
    %163 = arith.mulf %160, %146 : vector<8x32xf32>
    %164 = arith.mulf %159, %162 : vector<8x32xf32>
    %165 = arith.addf %163, %164 : vector<8x32xf32>
    %166 = math.tanh %165 : vector<8x32xf32>
    %167 = arith.mulf %161, %166 : vector<8x32xf32>
    %168 = tpu.concatenate %34, %53, %72, %91, %110, %129, %148, %167 in 0 : vector<8x32xf32>, vector<8x32xf32>, vector<8x32xf32>, vector<8x32xf32>, vector<8x32xf32>, vector<8x32xf32>, vector<8x32xf32>, vector<8x32xf32> -> vector<64x32xf32>
    %c0_i32_25 = arith.constant 0 : i32
    %169 = tpu.memref_slice %arg14[%c0_i32_25] : memref<2x!tpu.dma_semaphore, #tpu.memory_space<semaphore_mem>> -> memref<1x!tpu.dma_semaphore, #tpu.memory_space<semaphore_mem>>
    %170 = tpu.memref_squeeze %169 : memref<1x!tpu.dma_semaphore, #tpu.memory_space<semaphore_mem>> -> memref<!tpu.dma_semaphore, #tpu.memory_space<semaphore_mem>>
    tpu.wait_dma2 semaphore(%170 : memref<!tpu.dma_semaphore, #tpu.memory_space<semaphore_mem>>) src(%arg4 : memref<1x32x128xf32, #tpu.memory_space<any>>) dst(%arg12 : memref<1x32x128xf32, #tpu.memory_space<vmem>>)
    %c1_i32_26 = arith.constant 1 : i32
    %171 = tpu.memref_slice %arg14[%c1_i32_26] : memref<2x!tpu.dma_semaphore, #tpu.memory_space<semaphore_mem>> -> memref<1x!tpu.dma_semaphore, #tpu.memory_space<semaphore_mem>>
    %172 = tpu.memref_squeeze %171 : memref<1x!tpu.dma_semaphore, #tpu.memory_space<semaphore_mem>> -> memref<!tpu.dma_semaphore, #tpu.memory_space<semaphore_mem>>
    tpu.wait_dma2 semaphore(%172 : memref<!tpu.dma_semaphore, #tpu.memory_space<semaphore_mem>>) src(%arg5 : memref<1x32x128xf32, #tpu.memory_space<any>>) dst(%arg13 : memref<1x32x128xf32, #tpu.memory_space<vmem>>)
    %c0_27 = arith.constant 0 : index
    %c0_28 = arith.constant 0 : index
    %c0_29 = arith.constant 0 : index
    %173 = vector.load %arg12[%c0_27, %c0_28, %c0_29] : memref<1x32x128xf32, #tpu.memory_space<vmem>>, vector<1x32x128xf32>
    %174 = vector.shape_cast %173 : vector<1x32x128xf32> to vector<32x128xf32>
    %cst_30 = arith.constant dense<0.000000e+00> : vector<64x128xf32>
    %175 = tpu.matmul %168, %174, %cst_30 {dimension_numbers = #tpu.dot_dimension_numbers<[1], [0], [0], [1], [0, 0, 1, 1], [], []>} : vector<64x32xf32>, vector<32x128xf32>, vector<64x128xf32> -> vector<64x128xf32>
    %c0_31 = arith.constant 0 : index
    %c0_32 = arith.constant 0 : index
    %c0_33 = arith.constant 0 : index
    %176 = vector.load %arg6[%c0_31, %c0_32, %c0_33] : memref<1x1x128xf32, #tpu.memory_space<vmem>>, vector<1x1x128xf32>
    %177 = vector.shape_cast %176 : vector<1x1x128xf32> to vector<1x128xf32>
    %178 = vector.broadcast %177 : vector<1x128xf32> to vector<64x128xf32>
    %179 = arith.addf %175, %178 : vector<64x128xf32>
    %c0_34 = arith.constant 0 : index
    %c0_35 = arith.constant 0 : index
    %c0_36 = arith.constant 0 : index
    %180 = vector.load %arg13[%c0_34, %c0_35, %c0_36] : memref<1x32x128xf32, #tpu.memory_space<vmem>>, vector<1x32x128xf32>
    %181 = vector.shape_cast %180 : vector<1x32x128xf32> to vector<32x128xf32>
    %cst_37 = arith.constant 0.000000e+00 : f32
    %182 = vector.broadcast %cst_37 : f32 to vector<8x32xf32>
    %cst_38 = arith.constant 0.000000e+00 : f32
    %183 = vector.broadcast %cst_38 : f32 to vector<8x32xf32>
    %184 = vector.extract_strided_slice %179 {offsets = [0, 0], sizes = [8, 128], strides = [1, 1]} : vector<64x128xf32> to vector<8x128xf32>
    %cst_39 = arith.constant dense<0.000000e+00> : vector<8x128xf32>
    %185 = tpu.matmul %182, %181, %cst_39 {dimension_numbers = #tpu.dot_dimension_numbers<[1], [0], [0], [1], [0, 0, 1, 1], [], []>} : vector<8x32xf32>, vector<32x128xf32>, vector<8x128xf32> -> vector<8x128xf32>
    %186 = arith.addf %184, %185 : vector<8x128xf32>
    %187 = math.tanh %186 : vector<8x128xf32>
    %188 = arith.negf %186 : vector<8x128xf32>
    %189 = math.exp %188 : vector<8x128xf32>
    %cst_40 = arith.constant 1.000000e+00 : f32
    %190 = vector.broadcast %cst_40 : f32 to vector<8x128xf32>
    %191 = arith.addf %190, %189 : vector<8x128xf32>
    %192 = arith.divf %190, %191 : vector<8x128xf32>
    %193 = arith.select %6, %187, %192 : vector<8x128xi1>, vector<8x128xf32>
    %194 = vector.extract_strided_slice %193 {offsets = [0, 0], sizes = [8, 32], strides = [1, 1]} : vector<8x128xf32> to vector<8x32xf32>
    %195 = vector.extract_strided_slice %193 {offsets = [0, 32], sizes = [8, 32], strides = [1, 1]} : vector<8x128xf32> to vector<8x32xf32>
    %196 = vector.extract_strided_slice %193 {offsets = [0, 64], sizes = [8, 32], strides = [1, 1]} : vector<8x128xf32> to vector<8x32xf32>
    %197 = vector.extract_strided_slice %193 {offsets = [0, 96], sizes = [8, 32], strides = [1, 1]} : vector<8x128xf32> to vector<8x32xf32>
    %198 = arith.mulf %195, %183 : vector<8x32xf32>
    %199 = arith.mulf %194, %197 : vector<8x32xf32>
    %200 = arith.addf %198, %199 : vector<8x32xf32>
    %201 = math.tanh %200 : vector<8x32xf32>
    %202 = arith.mulf %196, %201 : vector<8x32xf32>
    %203 = vector.extract_strided_slice %179 {offsets = [8, 0], sizes = [8, 128], strides = [1, 1]} : vector<64x128xf32> to vector<8x128xf32>
    %cst_41 = arith.constant dense<0.000000e+00> : vector<8x128xf32>
    %204 = tpu.matmul %202, %181, %cst_41 {dimension_numbers = #tpu.dot_dimension_numbers<[1], [0], [0], [1], [0, 0, 1, 1], [], []>} : vector<8x32xf32>, vector<32x128xf32>, vector<8x128xf32> -> vector<8x128xf32>
    %205 = arith.addf %203, %204 : vector<8x128xf32>
    %206 = math.tanh %205 : vector<8x128xf32>
    %207 = arith.negf %205 : vector<8x128xf32>
    %208 = math.exp %207 : vector<8x128xf32>
    %cst_42 = arith.constant 1.000000e+00 : f32
    %209 = vector.broadcast %cst_42 : f32 to vector<8x128xf32>
    %210 = arith.addf %209, %208 : vector<8x128xf32>
    %211 = arith.divf %209, %210 : vector<8x128xf32>
    %212 = arith.select %6, %206, %211 : vector<8x128xi1>, vector<8x128xf32>
    %213 = vector.extract_strided_slice %212 {offsets = [0, 0], sizes = [8, 32], strides = [1, 1]} : vector<8x128xf32> to vector<8x32xf32>
    %214 = vector.extract_strided_slice %212 {offsets = [0, 32], sizes = [8, 32], strides = [1, 1]} : vector<8x128xf32> to vector<8x32xf32>
    %215 = vector.extract_strided_slice %212 {offsets = [0, 64], sizes = [8, 32], strides = [1, 1]} : vector<8x128xf32> to vector<8x32xf32>
    %216 = vector.extract_strided_slice %212 {offsets = [0, 96], sizes = [8, 32], strides = [1, 1]} : vector<8x128xf32> to vector<8x32xf32>
    %217 = arith.mulf %214, %200 : vector<8x32xf32>
    %218 = arith.mulf %213, %216 : vector<8x32xf32>
    %219 = arith.addf %217, %218 : vector<8x32xf32>
    %220 = math.tanh %219 : vector<8x32xf32>
    %221 = arith.mulf %215, %220 : vector<8x32xf32>
    %222 = vector.extract_strided_slice %179 {offsets = [16, 0], sizes = [8, 128], strides = [1, 1]} : vector<64x128xf32> to vector<8x128xf32>
    %cst_43 = arith.constant dense<0.000000e+00> : vector<8x128xf32>
    %223 = tpu.matmul %221, %181, %cst_43 {dimension_numbers = #tpu.dot_dimension_numbers<[1], [0], [0], [1], [0, 0, 1, 1], [], []>} : vector<8x32xf32>, vector<32x128xf32>, vector<8x128xf32> -> vector<8x128xf32>
    %224 = arith.addf %222, %223 : vector<8x128xf32>
    %225 = math.tanh %224 : vector<8x128xf32>
    %226 = arith.negf %224 : vector<8x128xf32>
    %227 = math.exp %226 : vector<8x128xf32>
    %cst_44 = arith.constant 1.000000e+00 : f32
    %228 = vector.broadcast %cst_44 : f32 to vector<8x128xf32>
    %229 = arith.addf %228, %227 : vector<8x128xf32>
    %230 = arith.divf %228, %229 : vector<8x128xf32>
    %231 = arith.select %6, %225, %230 : vector<8x128xi1>, vector<8x128xf32>
    %232 = vector.extract_strided_slice %231 {offsets = [0, 0], sizes = [8, 32], strides = [1, 1]} : vector<8x128xf32> to vector<8x32xf32>
    %233 = vector.extract_strided_slice %231 {offsets = [0, 32], sizes = [8, 32], strides = [1, 1]} : vector<8x128xf32> to vector<8x32xf32>
    %234 = vector.extract_strided_slice %231 {offsets = [0, 64], sizes = [8, 32], strides = [1, 1]} : vector<8x128xf32> to vector<8x32xf32>
    %235 = vector.extract_strided_slice %231 {offsets = [0, 96], sizes = [8, 32], strides = [1, 1]} : vector<8x128xf32> to vector<8x32xf32>
    %236 = arith.mulf %233, %219 : vector<8x32xf32>
    %237 = arith.mulf %232, %235 : vector<8x32xf32>
    %238 = arith.addf %236, %237 : vector<8x32xf32>
    %239 = math.tanh %238 : vector<8x32xf32>
    %240 = arith.mulf %234, %239 : vector<8x32xf32>
    %241 = vector.extract_strided_slice %179 {offsets = [24, 0], sizes = [8, 128], strides = [1, 1]} : vector<64x128xf32> to vector<8x128xf32>
    %cst_45 = arith.constant dense<0.000000e+00> : vector<8x128xf32>
    %242 = tpu.matmul %240, %181, %cst_45 {dimension_numbers = #tpu.dot_dimension_numbers<[1], [0], [0], [1], [0, 0, 1, 1], [], []>} : vector<8x32xf32>, vector<32x128xf32>, vector<8x128xf32> -> vector<8x128xf32>
    %243 = arith.addf %241, %242 : vector<8x128xf32>
    %244 = math.tanh %243 : vector<8x128xf32>
    %245 = arith.negf %243 : vector<8x128xf32>
    %246 = math.exp %245 : vector<8x128xf32>
    %cst_46 = arith.constant 1.000000e+00 : f32
    %247 = vector.broadcast %cst_46 : f32 to vector<8x128xf32>
    %248 = arith.addf %247, %246 : vector<8x128xf32>
    %249 = arith.divf %247, %248 : vector<8x128xf32>
    %250 = arith.select %6, %244, %249 : vector<8x128xi1>, vector<8x128xf32>
    %251 = vector.extract_strided_slice %250 {offsets = [0, 0], sizes = [8, 32], strides = [1, 1]} : vector<8x128xf32> to vector<8x32xf32>
    %252 = vector.extract_strided_slice %250 {offsets = [0, 32], sizes = [8, 32], strides = [1, 1]} : vector<8x128xf32> to vector<8x32xf32>
    %253 = vector.extract_strided_slice %250 {offsets = [0, 64], sizes = [8, 32], strides = [1, 1]} : vector<8x128xf32> to vector<8x32xf32>
    %254 = vector.extract_strided_slice %250 {offsets = [0, 96], sizes = [8, 32], strides = [1, 1]} : vector<8x128xf32> to vector<8x32xf32>
    %255 = arith.mulf %252, %238 : vector<8x32xf32>
    %256 = arith.mulf %251, %254 : vector<8x32xf32>
    %257 = arith.addf %255, %256 : vector<8x32xf32>
    %258 = math.tanh %257 : vector<8x32xf32>
    %259 = arith.mulf %253, %258 : vector<8x32xf32>
    %260 = vector.extract_strided_slice %179 {offsets = [32, 0], sizes = [8, 128], strides = [1, 1]} : vector<64x128xf32> to vector<8x128xf32>
    %cst_47 = arith.constant dense<0.000000e+00> : vector<8x128xf32>
    %261 = tpu.matmul %259, %181, %cst_47 {dimension_numbers = #tpu.dot_dimension_numbers<[1], [0], [0], [1], [0, 0, 1, 1], [], []>} : vector<8x32xf32>, vector<32x128xf32>, vector<8x128xf32> -> vector<8x128xf32>
    %262 = arith.addf %260, %261 : vector<8x128xf32>
    %263 = math.tanh %262 : vector<8x128xf32>
    %264 = arith.negf %262 : vector<8x128xf32>
    %265 = math.exp %264 : vector<8x128xf32>
    %cst_48 = arith.constant 1.000000e+00 : f32
    %266 = vector.broadcast %cst_48 : f32 to vector<8x128xf32>
    %267 = arith.addf %266, %265 : vector<8x128xf32>
    %268 = arith.divf %266, %267 : vector<8x128xf32>
    %269 = arith.select %6, %263, %268 : vector<8x128xi1>, vector<8x128xf32>
    %270 = vector.extract_strided_slice %269 {offsets = [0, 0], sizes = [8, 32], strides = [1, 1]} : vector<8x128xf32> to vector<8x32xf32>
    %271 = vector.extract_strided_slice %269 {offsets = [0, 32], sizes = [8, 32], strides = [1, 1]} : vector<8x128xf32> to vector<8x32xf32>
    %272 = vector.extract_strided_slice %269 {offsets = [0, 64], sizes = [8, 32], strides = [1, 1]} : vector<8x128xf32> to vector<8x32xf32>
    %273 = vector.extract_strided_slice %269 {offsets = [0, 96], sizes = [8, 32], strides = [1, 1]} : vector<8x128xf32> to vector<8x32xf32>
    %274 = arith.mulf %271, %257 : vector<8x32xf32>
    %275 = arith.mulf %270, %273 : vector<8x32xf32>
    %276 = arith.addf %274, %275 : vector<8x32xf32>
    %277 = math.tanh %276 : vector<8x32xf32>
    %278 = arith.mulf %272, %277 : vector<8x32xf32>
    %279 = vector.extract_strided_slice %179 {offsets = [40, 0], sizes = [8, 128], strides = [1, 1]} : vector<64x128xf32> to vector<8x128xf32>
    %cst_49 = arith.constant dense<0.000000e+00> : vector<8x128xf32>
    %280 = tpu.matmul %278, %181, %cst_49 {dimension_numbers = #tpu.dot_dimension_numbers<[1], [0], [0], [1], [0, 0, 1, 1], [], []>} : vector<8x32xf32>, vector<32x128xf32>, vector<8x128xf32> -> vector<8x128xf32>
    %281 = arith.addf %279, %280 : vector<8x128xf32>
    %282 = math.tanh %281 : vector<8x128xf32>
    %283 = arith.negf %281 : vector<8x128xf32>
    %284 = math.exp %283 : vector<8x128xf32>
    %cst_50 = arith.constant 1.000000e+00 : f32
    %285 = vector.broadcast %cst_50 : f32 to vector<8x128xf32>
    %286 = arith.addf %285, %284 : vector<8x128xf32>
    %287 = arith.divf %285, %286 : vector<8x128xf32>
    %288 = arith.select %6, %282, %287 : vector<8x128xi1>, vector<8x128xf32>
    %289 = vector.extract_strided_slice %288 {offsets = [0, 0], sizes = [8, 32], strides = [1, 1]} : vector<8x128xf32> to vector<8x32xf32>
    %290 = vector.extract_strided_slice %288 {offsets = [0, 32], sizes = [8, 32], strides = [1, 1]} : vector<8x128xf32> to vector<8x32xf32>
    %291 = vector.extract_strided_slice %288 {offsets = [0, 64], sizes = [8, 32], strides = [1, 1]} : vector<8x128xf32> to vector<8x32xf32>
    %292 = vector.extract_strided_slice %288 {offsets = [0, 96], sizes = [8, 32], strides = [1, 1]} : vector<8x128xf32> to vector<8x32xf32>
    %293 = arith.mulf %290, %276 : vector<8x32xf32>
    %294 = arith.mulf %289, %292 : vector<8x32xf32>
    %295 = arith.addf %293, %294 : vector<8x32xf32>
    %296 = math.tanh %295 : vector<8x32xf32>
    %297 = arith.mulf %291, %296 : vector<8x32xf32>
    %298 = vector.extract_strided_slice %179 {offsets = [48, 0], sizes = [8, 128], strides = [1, 1]} : vector<64x128xf32> to vector<8x128xf32>
    %cst_51 = arith.constant dense<0.000000e+00> : vector<8x128xf32>
    %299 = tpu.matmul %297, %181, %cst_51 {dimension_numbers = #tpu.dot_dimension_numbers<[1], [0], [0], [1], [0, 0, 1, 1], [], []>} : vector<8x32xf32>, vector<32x128xf32>, vector<8x128xf32> -> vector<8x128xf32>
    %300 = arith.addf %298, %299 : vector<8x128xf32>
    %301 = math.tanh %300 : vector<8x128xf32>
    %302 = arith.negf %300 : vector<8x128xf32>
    %303 = math.exp %302 : vector<8x128xf32>
    %cst_52 = arith.constant 1.000000e+00 : f32
    %304 = vector.broadcast %cst_52 : f32 to vector<8x128xf32>
    %305 = arith.addf %304, %303 : vector<8x128xf32>
    %306 = arith.divf %304, %305 : vector<8x128xf32>
    %307 = arith.select %6, %301, %306 : vector<8x128xi1>, vector<8x128xf32>
    %308 = vector.extract_strided_slice %307 {offsets = [0, 0], sizes = [8, 32], strides = [1, 1]} : vector<8x128xf32> to vector<8x32xf32>
    %309 = vector.extract_strided_slice %307 {offsets = [0, 32], sizes = [8, 32], strides = [1, 1]} : vector<8x128xf32> to vector<8x32xf32>
    %310 = vector.extract_strided_slice %307 {offsets = [0, 64], sizes = [8, 32], strides = [1, 1]} : vector<8x128xf32> to vector<8x32xf32>
    %311 = vector.extract_strided_slice %307 {offsets = [0, 96], sizes = [8, 32], strides = [1, 1]} : vector<8x128xf32> to vector<8x32xf32>
    %312 = arith.mulf %309, %295 : vector<8x32xf32>
    %313 = arith.mulf %308, %311 : vector<8x32xf32>
    %314 = arith.addf %312, %313 : vector<8x32xf32>
    %315 = math.tanh %314 : vector<8x32xf32>
    %316 = arith.mulf %310, %315 : vector<8x32xf32>
    %317 = vector.extract_strided_slice %179 {offsets = [56, 0], sizes = [8, 128], strides = [1, 1]} : vector<64x128xf32> to vector<8x128xf32>
    %cst_53 = arith.constant dense<0.000000e+00> : vector<8x128xf32>
    %318 = tpu.matmul %316, %181, %cst_53 {dimension_numbers = #tpu.dot_dimension_numbers<[1], [0], [0], [1], [0, 0, 1, 1], [], []>} : vector<8x32xf32>, vector<32x128xf32>, vector<8x128xf32> -> vector<8x128xf32>
    %319 = arith.addf %317, %318 : vector<8x128xf32>
    %320 = math.tanh %319 : vector<8x128xf32>
    %321 = arith.negf %319 : vector<8x128xf32>
    %322 = math.exp %321 : vector<8x128xf32>
    %cst_54 = arith.constant 1.000000e+00 : f32
    %323 = vector.broadcast %cst_54 : f32 to vector<8x128xf32>
    %324 = arith.addf %323, %322 : vector<8x128xf32>
    %325 = arith.divf %323, %324 : vector<8x128xf32>
    %326 = arith.select %6, %320, %325 : vector<8x128xi1>, vector<8x128xf32>
    %327 = vector.extract_strided_slice %326 {offsets = [0, 0], sizes = [8, 32], strides = [1, 1]} : vector<8x128xf32> to vector<8x32xf32>
    %328 = vector.extract_strided_slice %326 {offsets = [0, 32], sizes = [8, 32], strides = [1, 1]} : vector<8x128xf32> to vector<8x32xf32>
    %329 = vector.extract_strided_slice %326 {offsets = [0, 64], sizes = [8, 32], strides = [1, 1]} : vector<8x128xf32> to vector<8x32xf32>
    %330 = vector.extract_strided_slice %326 {offsets = [0, 96], sizes = [8, 32], strides = [1, 1]} : vector<8x128xf32> to vector<8x32xf32>
    %331 = arith.mulf %328, %314 : vector<8x32xf32>
    %332 = arith.mulf %327, %330 : vector<8x32xf32>
    %333 = arith.addf %331, %332 : vector<8x32xf32>
    %334 = math.tanh %333 : vector<8x32xf32>
    %335 = arith.mulf %329, %334 : vector<8x32xf32>
    %c0_55 = arith.constant 0 : index
    %c0_56 = arith.constant 0 : index
    %336 = vector.load %arg7[%c0_55, %c0_56] : memref<32x16xf32, #tpu.memory_space<vmem>>, vector<32x16xf32>
    %cst_57 = arith.constant dense<0.000000e+00> : vector<8x16xf32>
    %337 = tpu.matmul %335, %336, %cst_57 {dimension_numbers = #tpu.dot_dimension_numbers<[1], [0], [0], [1], [0, 0, 1, 1], [], []>} : vector<8x32xf32>, vector<32x16xf32>, vector<8x16xf32> -> vector<8x16xf32>
    %c0_58 = arith.constant 0 : index
    %c0_59 = arith.constant 0 : index
    %338 = vector.load %arg8[%c0_58, %c0_59] : memref<1x16xf32, #tpu.memory_space<vmem>>, vector<1x16xf32>
    %339 = vector.broadcast %338 : vector<1x16xf32> to vector<8x16xf32>
    %340 = arith.addf %337, %339 : vector<8x16xf32>
    %cst_60 = arith.constant 0.000000e+00 : f32
    %341 = vector.broadcast %cst_60 : f32 to vector<8x16xf32>
    %342 = arith.maximumf %340, %341 : vector<8x16xf32>
    %c0_61 = arith.constant 0 : index
    %c0_62 = arith.constant 0 : index
    %343 = vector.load %arg9[%c0_61, %c0_62] : memref<16x128xf32, #tpu.memory_space<vmem>>, vector<16x128xf32>
    %cst_63 = arith.constant dense<0.000000e+00> : vector<8x128xf32>
    %344 = tpu.matmul %342, %343, %cst_63 {dimension_numbers = #tpu.dot_dimension_numbers<[1], [0], [0], [1], [0, 0, 1, 1], [], []>} : vector<8x16xf32>, vector<16x128xf32>, vector<8x128xf32> -> vector<8x128xf32>
    %c0_64 = arith.constant 0 : index
    %c0_65 = arith.constant 0 : index
    %345 = vector.load %arg10[%c0_64, %c0_65] : memref<1x128xf32, #tpu.memory_space<vmem>>, vector<1x128xf32>
    %346 = vector.broadcast %345 : vector<1x128xf32> to vector<8x128xf32>
    %347 = arith.addf %344, %346 : vector<8x128xf32>
    %c0_66 = arith.constant 0 : index
    %c0_67 = arith.constant 0 : index
    %348 = vector.load %arg11[%c0_66, %c0_67] : memref<8x128xf32, #tpu.memory_space<vmem>>, vector<8x128xf32>
    tpu.vector_store %arg11[%c0_66, %c0_67], %347 {strides = array<i32>} : memref<8x128xf32, #tpu.memory_space<vmem>>, vector<8x128xf32>,
    return
  }
}

</mosaic_0001>

<llo_original>
// kernel: lstm_forward.1
$region0: #{lstm_forward.1}
  #allocation0 [shape = 'u32[]', space=smem, size = 0x4, offset = 0x4, fixed_abs, tag = 'smem constant byte address 0x4 - core index']
  #allocation1 [shape = 'u32[144,128]{1,0:T(1,128)}', space=vmem, size = 0x12000, scoped, tag = 'internal scratch']
  #allocation2 [shape = 'f32[1,32,128]{2,1,0:T(8,128)}', space=vmem, size = 0x4000, scoped, tag = 'scratch operand']
  #allocation3 [shape = 'f32[1,32,128]{2,1,0:T(8,128)}', space=vmem, size = 0x4000, scoped, tag = 'scratch operand']
  #allocation4 [shape = 's32[2]{0}', space=sflag, size = 0x8, scoped, tag = 'scratch operand']
  #allocation5 [shape = 's32[]', space=sflag, size = 0x4, offset = 0, fixed_abs, tag = 'sflag constant byte address 0x0 - dummy sync flag']
  #allocation6 [shape = 's32[]', space=sflag, size = 0x4, offset = 0, fixed_abs, tag = 'sflag constant byte address 0x0 - dummy sync flag']
  %s0 = inlined_call_operand.vmem [shape: f32[64,32], index: 0, kind: input, shape index: {}]
  %s1 = inlined_call_operand.vmem [shape: f32[32,128], index: 1, kind: input, shape index: {}]
  %s2 = inlined_call_operand.vmem [shape: f32[32,128], index: 2, kind: input, shape index: {}]
  %s3 = inlined_call_operand.vmem [shape: f32[1,128], index: 3, kind: input, shape index: {}]
  %s4 = inlined_call_operand.vmem [shape: f32[1,32,128], index: 4, kind: input, shape index: {}]
  %s5 = inlined_call_operand.vmem [shape: f32[1,32,128], index: 5, kind: input, shape index: {}]
  %s6 = inlined_call_operand.vmem [shape: f32[1,1,128], index: 6, kind: input, shape index: {}]
  %s7 = inlined_call_operand.vmem [shape: f32[32,16], index: 7, kind: input, shape index: {}]
  %s8 = inlined_call_operand.vmem [shape: f32[1,16], index: 8, kind: input, shape index: {}]
  %s9 = inlined_call_operand.vmem [shape: f32[16,128], index: 9, kind: input, shape index: {}]
  %s10 = inlined_call_operand.vmem [shape: f32[1,128], index: 10, kind: input, shape index: {}]
  %s11 = inlined_call_operand.vmem [shape: f32[8,128], index: 11, kind: output, shape index: {}]
  %s12 = sld [smem:[#allocation0]]
  $region114: #{lstm_forward.1} parent=0
    _
  %s14 = ssub.s32 1, %s12
  %s15 = scalar_select 0, %s14, %s12
  // Predicated region
  $region2: #{lstm_forward.1} parent=0 // pred_check
    _
  $region3: #{lstm_forward.1} parent=0 // pred_check_branch
    %17 = sbr.rel (0) target = $region5
  $region4: #{lstm_forward.1} parent=0 // pred_region
    _
  $region5: #{lstm_forward.1} parent=0 // pred_fallthru
    _
  // Predicated region
  $region6: #{lstm_forward.1} parent=0 // pred_check
    _
  $region7: #{lstm_forward.1} parent=0 // pred_check_branch
    %19 = sbr.rel (0) target = $region9
  $region8: #{lstm_forward.1} parent=0 // pred_region
    _
  $region9: #{lstm_forward.1} parent=0 // pred_fallthru
    _
  // Predicated region
  $region10: #{lstm_forward.1} parent=0 // pred_check
    _
  $region11: #{lstm_forward.1} parent=0 // pred_check_branch
    %21 = sbr.rel (0) target = $region13
  $region12: #{lstm_forward.1} parent=0 // pred_region
    _
  $region13: #{lstm_forward.1} parent=0 // pred_fallthru
    _
  // Predicated region
  $region14: #{lstm_forward.1} parent=0 // pred_check
    _
  $region15: #{lstm_forward.1} parent=0 // pred_check_branch
    %23 = sbr.rel (0) target = $region17
  $region16: #{lstm_forward.1} parent=0 // pred_region
    _
  $region17: #{lstm_forward.1} parent=0 // pred_fallthru
    _
  // Predicated region
  $region18: #{lstm_forward.1} parent=0 // pred_check
    _
  $region19: #{lstm_forward.1} parent=0 // pred_check_branch
    %25 = sbr.rel (0) target = $region21
  $region20: #{lstm_forward.1} parent=0 // pred_region
    _
  $region21: #{lstm_forward.1} parent=0 // pred_fallthru
    _
  // Predicated region
  $region22: #{lstm_forward.1} parent=0 // pred_check
    _
  $region23: #{lstm_forward.1} parent=0 // pred_check_branch
    %27 = sbr.rel (0) target = $region25
  $region24: #{lstm_forward.1} parent=0 // pred_region
    _
  $region25: #{lstm_forward.1} parent=0 // pred_fallthru
    _
  // Predicated region
  $region26: #{lstm_forward.1} parent=0 // pred_check
    _
  $region27: #{lstm_forward.1} parent=0 // pred_check_branch
    %29 = sbr.rel (0) target = $region29
  $region28: #{lstm_forward.1} parent=0 // pred_region
    _
  $region29: #{lstm_forward.1} parent=0 // pred_fallthru
    _
  // Predicated region
  $region30: #{lstm_forward.1} parent=0 // pred_check
    _
  $region31: #{lstm_forward.1} parent=0 // pred_check_branch
    %31 = sbr.rel (0) target = $region33
  $region32: #{lstm_forward.1} parent=0 // pred_region
    _
  $region33: #{lstm_forward.1} parent=0 // pred_fallthru
    _
  // Predicated region
  $region34: #{lstm_forward.1} parent=0 // pred_check
    _
  $region35: #{lstm_forward.1} parent=0 // pred_check_branch
    %33 = sbr.rel (0) target = $region37
  $region36: #{lstm_forward.1} parent=0 // pred_region
    _
  $region37: #{lstm_forward.1} parent=0 // pred_fallthru
    _
  %p35 = scmp.lt.u32.totalorder 32, 8
  %p36 = pneg %p35
  // Predicated region
  $region38: #{lstm_forward.1} parent=0 // pred_check
    _
  $region39: #{lstm_forward.1} parent=0 // pred_check_branch
    %38 = sbr.rel (%p35) target = $region41
  $region40: #{lstm_forward.1} parent=0 // pred_region
    %s54 = sand.u32 32, 7
    %p55 = scmp.eq.s32.totalorder %s54, 0
    // Predicated region
    $region53: #{lstm_forward.1} parent=40 // pred_check
      %p56 = pneg %p55
    $region54: #{lstm_forward.1} parent=40 // pred_check_branch
      %58 = sbr.rel (%p56) target = $region56
    $region55: #{lstm_forward.1} parent=40 // pred_region
      loop: start=0, step=1, limit=1
      $region57: #{lstm_forward.1} parent=55 // loop_pre_header
        _
      $region58: #{lstm_forward.1} parent=55 // loop_header
        %s60 = sphi 0, %s64
        %p61 = scmp.ge.s32.totalorder %s60, 1
        %s65 = sphi %s4, %s4
        %s66 = sphi [#allocation2], [#allocation2]
      $region59: #{lstm_forward.1} parent=55 // loop_header_branch
        %63 = sbr.rel (%p61) target = $region63
      $region60: #{lstm_forward.1} parent=55 // loop_body
        %v67 = vld [vmem:[%s65] sm:$0xff]
        %68 = vst [vmem:[%s66] sm:$0xff] %v67
        %v69 = vld [vmem:[%s65 + $0x8] sm:$0xff]
        %70 = vst [vmem:[%s66 + $0x8] sm:$0xff] %v69
        %v71 = vld [vmem:[%s65 + $0x10] sm:$0xff]
        %72 = vst [vmem:[%s66 + $0x10] sm:$0xff] %v71
        %v73 = vld [vmem:[%s65 + $0x18] sm:$0xff]
        %74 = vst [vmem:[%s66 + $0x18] sm:$0xff] %v73
      $region61: #{lstm_forward.1} parent=55 // loop_footer
        %s64 = sadd.s32 1, %s60
      $region62: #{lstm_forward.1} parent=55 // loop_footer_branch
        %59 = sbr.rel target = $region58
      $region63: #{lstm_forward.1} parent=55 // loop_exit
        _
    $region56: #{lstm_forward.1} parent=40 // pred_fallthru
      _
    %p75 = pneg %p55
    // Predicated region
    $region64: #{lstm_forward.1} parent=40 // pred_check
      _
    $region65: #{lstm_forward.1} parent=40 // pred_check_branch
      %77 = sbr.rel (%p55) target = $region67
    $region66: #{lstm_forward.1} parent=40 // pred_region
      %s78 = sand.u32 32, 7
    $region67: #{lstm_forward.1} parent=40 // pred_fallthru
      _
  $region41: #{lstm_forward.1} parent=0 // pred_fallthru
    _
  // Predicated region
  $region42: #{lstm_forward.1} parent=0 // pred_check
    %p39 = pneg %p35
  $region43: #{lstm_forward.1} parent=0 // pred_check_branch
    %41 = sbr.rel (%p39) target = $region45
  $region44: #{lstm_forward.1} parent=0 // pred_region
    %s42 = sshll.u32 1, 32
    %s43 = ssub.s32 %s42, 1
    loop: start=0, step=1, limit=1
    $region46: #{lstm_forward.1} parent=44 // loop_pre_header
      _
    $region47: #{lstm_forward.1} parent=44 // loop_header
      %s45 = sphi 0, %s49
      %p46 = scmp.ge.s32.totalorder %s45, 1
      %s50 = sphi %s4, %s4
      %s51 = sphi [#allocation2], [#allocation2]
    $region48: #{lstm_forward.1} parent=44 // loop_header_branch
      %48 = sbr.rel (%p46) target = $region52
    $region49: #{lstm_forward.1} parent=44 // loop_body
      %v52 = vld [vmem:[%s50] sm:%s43]
      %53 = vst [vmem:[%s51] sm:%s43] %v52
    $region50: #{lstm_forward.1} parent=44 // loop_footer
      %s49 = sadd.s32 1, %s45
    $region51: #{lstm_forward.1} parent=44 // loop_footer_branch
      %44 = sbr.rel target = $region47
    $region52: #{lstm_forward.1} parent=44 // loop_exit
      _
  $region45: #{lstm_forward.1} parent=0 // pred_fallthru
    _
  // Predicated region
  $region68: #{lstm_forward.1} parent=0 // pred_check
    _
  $region69: #{lstm_forward.1} parent=0 // pred_check_branch
    %81 = sbr.rel (0) target = $region71
  $region70: #{lstm_forward.1} parent=0 // pred_region
    %82 = vsyncadd [#allocation4], 512
  $region71: #{lstm_forward.1} parent=0 // pred_fallthru
    _
  %s83 = scalar_lea.sflag [#allocation4], 1
  %p85 = scmp.lt.u32.totalorder 32, 8
  %p86 = pneg %p85
  // Predicated region
  $region72: #{lstm_forward.1} parent=0 // pred_check
    _
  $region73: #{lstm_forward.1} parent=0 // pred_check_branch
    %88 = sbr.rel (%p85) target = $region75
  $region74: #{lstm_forward.1} parent=0 // pred_region
    %s104 = sand.u32 32, 7
    %p105 = scmp.eq.s32.totalorder %s104, 0
    // Predicated region
    $region87: #{lstm_forward.1} parent=74 // pred_check
      %p106 = pneg %p105
    $region88: #{lstm_forward.1} parent=74 // pred_check_branch
      %108 = sbr.rel (%p106) target = $region90
    $region89: #{lstm_forward.1} parent=74 // pred_region
      loop: start=0, step=1, limit=1
      $region91: #{lstm_forward.1} parent=89 // loop_pre_header
        _
      $region92: #{lstm_forward.1} parent=89 // loop_header
        %s110 = sphi 0, %s114
        %p111 = scmp.ge.s32.totalorder %s110, 1
        %s115 = sphi %s5, %s5
        %s116 = sphi [#allocation3], [#allocation3]
      $region93: #{lstm_forward.1} parent=89 // loop_header_branch
        %113 = sbr.rel (%p111) target = $region97
      $region94: #{lstm_forward.1} parent=89 // loop_body
        %v117 = vld [vmem:[%s115] sm:$0xff]
        %118 = vst [vmem:[%s116] sm:$0xff] %v117
        %v119 = vld [vmem:[%s115 + $0x8] sm:$0xff]
        %120 = vst [vmem:[%s116 + $0x8] sm:$0xff] %v119
        %v121 = vld [vmem:[%s115 + $0x10] sm:$0xff]
        %122 = vst [vmem:[%s116 + $0x10] sm:$0xff] %v121
        %v123 = vld [vmem:[%s115 + $0x18] sm:$0xff]
        %124 = vst [vmem:[%s116 + $0x18] sm:$0xff] %v123
      $region95: #{lstm_forward.1} parent=89 // loop_footer
        %s114 = sadd.s32 1, %s110
      $region96: #{lstm_forward.1} parent=89 // loop_footer_branch
        %109 = sbr.rel target = $region92
      $region97: #{lstm_forward.1} parent=89 // loop_exit
        _
    $region90: #{lstm_forward.1} parent=74 // pred_fallthru
      _
    %p125 = pneg %p105
    // Predicated region
    $region98: #{lstm_forward.1} parent=74 // pred_check
      _
    $region99: #{lstm_forward.1} parent=74 // pred_check_branch
      %127 = sbr.rel (%p105) target = $region101
    $region100: #{lstm_forward.1} parent=74 // pred_region
      %s128 = sand.u32 32, 7
    $region101: #{lstm_forward.1} parent=74 // pred_fallthru
      _
  $region75: #{lstm_forward.1} parent=0 // pred_fallthru
    _
  // Predicated region
  $region76: #{lstm_forward.1} parent=0 // pred_check
    %p89 = pneg %p85
  $region77: #{lstm_forward.1} parent=0 // pred_check_branch
    %91 = sbr.rel (%p89) target = $region79
  $region78: #{lstm_forward.1} parent=0 // pred_region
    %s92 = sshll.u32 1, 32
    %s93 = ssub.s32 %s92, 1
    loop: start=0, step=1, limit=1
    $region80: #{lstm_forward.1} parent=78 // loop_pre_header
      _
    $region81: #{lstm_forward.1} parent=78 // loop_header
      %s95 = sphi 0, %s99
      %p96 = scmp.ge.s32.totalorder %s95, 1
      %s100 = sphi %s5, %s5
      %s101 = sphi [#allocation3], [#allocation3]
    $region82: #{lstm_forward.1} parent=78 // loop_header_branch
      %98 = sbr.rel (%p96) target = $region86
    $region83: #{lstm_forward.1} parent=78 // loop_body
      %v102 = vld [vmem:[%s100] sm:%s93]
      %103 = vst [vmem:[%s101] sm:%s93] %v102
    $region84: #{lstm_forward.1} parent=78 // loop_footer
      %s99 = sadd.s32 1, %s95
    $region85: #{lstm_forward.1} parent=78 // loop_footer_branch
      %94 = sbr.rel target = $region81
    $region86: #{lstm_forward.1} parent=78 // loop_exit
      _
  $region79: #{lstm_forward.1} parent=0 // pred_fallthru
    _
  // Predicated region
  $region102: #{lstm_forward.1} parent=0 // pred_check
    _
  $region103: #{lstm_forward.1} parent=0 // pred_check_branch
    %131 = sbr.rel (0) target = $region105
  $region104: #{lstm_forward.1} parent=0 // pred_region
    %132 = vsyncadd %s83, 512
  $region105: #{lstm_forward.1} parent=0 // pred_fallthru
    _
  %v133 = vlaneseq
  %v134 = vand.u32 %v133, 127
  %vm135 = vcmp.ge.s32.totalorder %v134, 96
  %v136 = vld [vmem:[%s0] sm:$0xff]
  %v137 = vld [vmem:[%s0 + $0x8] sm:$0xff]
  %v138 = vld [vmem:[%s0 + $0x10] sm:$0xff]
  %v139 = vld [vmem:[%s0 + $0x18] sm:$0xff]
  %v140 = vld [vmem:[%s0 + $0x20] sm:$0xff]
  %v141 = vld [vmem:[%s0 + $0x28] sm:$0xff]
  %v142 = vld [vmem:[%s0 + $0x30] sm:$0xff]
  %v143 = vld [vmem:[%s0 + $0x38] sm:$0xff]
  %v144 = vld [vmem:[%s1] sm:$0xff]
  %v145 = vld [vmem:[%s1 + $0x8] sm:$0xff]
  %v146 = vld [vmem:[%s1 + $0x10] sm:$0xff]
  %v147 = vld [vmem:[%s1 + $0x18] sm:$0xff]
  %v148 = vld [vmem:[%s3] sm:$0x1]
  %v150 = vlaneseq
  %v151 = vshrl.u32 %v150, 7
  %v152 = vsub.s32 0, %v151
  %v153 = vrot.slane %v148, %v152
  %vm155 = vcmask 261120
  %v157 = vsel %vm155, %v136, 0
  %v160 = vsel %vm155, %v137, 0
  %v163 = vsel %vm155, %v138, 0
  %v166 = vsel %vm155, %v139, 0
  %v169 = vsel %vm155, %v140, 0
  %v172 = vsel %vm155, %v141, 0
  %v175 = vsel %vm155, %v142, 0
  %v178 = vsel %vm155, %v143, 0
  %180 = vmatprep.subr.mxu0 0.0
  %181 = vmatpush1.msra.mxu0 0.0
  %182 = vmatprep.subr.mxu0 0.0
  %183 = vmatpush1.msra.mxu0 0.0
  %184 = vmatprep.subr.mxu0 0.0
  %185 = vmatpush1.msra.mxu0 0.0
  %186 = vmatprep.subr.mxu0 0.0
  %187 = vmatpush1.msra.mxu0 0.0
  %188 = vmatprep.subr.mxu0 0.0
  %189 = vmatpush1.msra.mxu0 0.0
  %190 = vmatprep.subr.mxu0 0.0
  %191 = vmatpush1.msra.mxu0 0.0
  %192 = vmatprep.subr.mxu0 0.0
  %193 = vmatpush1.msra.mxu0 0.0
  %194 = vmatprep.subr.mxu0 0.0
  %195 = vmatpush1.msra.mxu0 0.0
  %196 = vmatprep.subr.mxu0 0.0
  %197 = vmatpush1.msra.mxu0 0.0
  %198 = vmatprep.subr.mxu0 0.0
  %199 = vmatpush1.msra.mxu0 0.0
  %200 = vmatprep.subr.mxu0 0.0
  %201 = vmatpush1.msra.mxu0 0.0
  %202 = vmatprep.subr.mxu0 0.0
  %203 = vmatpush1.msra.mxu0 0.0
  %204 = vmatprep.subr.mxu0 0.0
  %205 = vmatpush1.msra.mxu0 %v147
  %206 = vmatprep.subr.mxu0 0.0
  %207 = vmatpush1.msra.mxu0 %v146
  %208 = vmatprep.subr.mxu0 0.0
  %209 = vmatpush1.msra.mxu0 %v145
  %210 = vmatprep.subr.mxu0 0.0
  %211 = vmatpush1.msra.mxu0 %v144
  %212 = vmatprep.subr.mxu0 0.0
  %213 = vmatpush2.msra.mxu0 0.0
  %214 = vmatprep.subr.mxu0 0.0
  %215 = vmatpush2.msra.mxu0 0.0
  %216 = vmatprep.subr.mxu0 0.0
  %217 = vmatpush2.msra.mxu0 0.0
  %218 = vmatprep.subr.mxu0 0.0
  %219 = vmatpush2.msra.mxu0 0.0
  %220 = vmatprep.subr.mxu0 0.0
  %221 = vmatpush2.msra.mxu0 0.0
  %222 = vmatprep.subr.mxu0 0.0
  %223 = vmatpush2.msra.mxu0 0.0
  %224 = vmatprep.subr.mxu0 0.0
  %225 = vmatpush2.msra.mxu0 0.0
  %226 = vmatprep.subr.mxu0 0.0
  %227 = vmatpush2.msra.mxu0 0.0
  %228 = vmatprep.subr.mxu0 0.0
  %229 = vmatpush2.msra.mxu0 0.0
  %230 = vmatprep.subr.mxu0 0.0
  %231 = vmatpush2.msra.mxu0 0.0
  %232 = vmatprep.subr.mxu0 0.0
  %233 = vmatpush2.msra.mxu0 0.0
  %234 = vmatprep.subr.mxu0 0.0
  %235 = vmatpush2.msra.mxu0 0.0
  %236 = vmatprep.subr.mxu0 0.0
  %237 = vmatpush2.msra.mxu0 0.0
  %238 = vmatprep.subr.mxu0 0.0
  %239 = vmatpush2.msra.mxu0 0.0
  %240 = vmatprep.subr.mxu0 0.0
  %241 = vmatpush2.msra.mxu0 0.0
  %242 = vmatprep.subr.mxu0 0.0
  %243 = vmatpush2.msra.mxu0 0.0
  %244 = vmatprep.mubr.f32.mxu0 0.0
  %245 = vmatmul.mubr.f32.gmra.mxu0 %v157
  %v246 = vpop.f32.mrf.mxu0
  %v247 = vadd.f32 %v153, %v246
  %v248 = vpop.f32.mrf.mxu0
  %249 = vmatprep.mubr.f32.mxu0 0.0
  %250 = vmatmul.mubr.f32.gmra.mxu0 %v160
  %v251 = vpop.f32.mrf.mxu0
  %v252 = vadd.f32 %v153, %v251
  %v253 = vpop.f32.mrf.mxu0
  %254 = vmatprep.mubr.f32.mxu0 0.0
  %255 = vmatmul.mubr.f32.gmra.mxu0 %v163
  %v256 = vpop.f32.mrf.mxu0
  %v257 = vadd.f32 %v153, %v256
  %v258 = vpop.f32.mrf.mxu0
  %259 = vmatprep.mubr.f32.mxu0 0.0
  %260 = vmatmul.mubr.f32.gmra.mxu0 %v166
  %v261 = vpop.f32.mrf.mxu0
  %v262 = vadd.f32 %v153, %v261
  %v263 = vpop.f32.mrf.mxu0
  %264 = vmatprep.mubr.f32.mxu0 0.0
  %265 = vmatmul.mubr.f32.gmra.mxu0 %v169
  %v266 = vpop.f32.mrf.mxu0
  %v267 = vadd.f32 %v153, %v266
  %v268 = vpop.f32.mrf.mxu0
  %269 = vmatprep.mubr.f32.mxu0 0.0
  %270 = vmatmul.mubr.f32.gmra.mxu0 %v172
  %v271 = vpop.f32.mrf.mxu0
  %v272 = vadd.f32 %v153, %v271
  %v273 = vpop.f32.mrf.mxu0
  %274 = vmatprep.mubr.f32.mxu0 0.0
  %275 = vmatmul.mubr.f32.gmra.mxu0 %v175
  %v276 = vpop.f32.mrf.mxu0
  %v277 = vadd.f32 %v153, %v276
  %v278 = vpop.f32.mrf.mxu0
  %279 = vmatprep.mubr.f32.mxu0 0.0
  %280 = vmatmul.mubr.f32.gmra.mxu0 %v178
  %v281 = vpop.f32.mrf.mxu0
  %v282 = vadd.f32 %v153, %v281
  %v283 = vpop.f32.mrf.mxu0
  %284 = vdwg.mxu0
  %v285 = vld [vmem:[%s2] sm:$0xff]
  %v286 = vld [vmem:[%s2 + $0x8] sm:$0xff]
  %v287 = vld [vmem:[%s2 + $0x10] sm:$0xff]
  %v288 = vld [vmem:[%s2 + $0x18] sm:$0xff]
  %v290 = vsel %vm155, 0.0, 0
  %292 = vmatprep.subr.mxu0 0.0
  %293 = vmatpush1.msra.mxu0 0.0
  %294 = vmatprep.subr.mxu0 0.0
  %295 = vmatpush1.msra.mxu0 0.0
  %296 = vmatprep.subr.mxu0 0.0
  %297 = vmatpush1.msra.mxu0 0.0
  %298 = vmatprep.subr.mxu0 0.0
  %299 = vmatpush1.msra.mxu0 0.0
  %300 = vmatprep.subr.mxu0 0.0
  %301 = vmatpush1.msra.mxu0 0.0
  %302 = vmatprep.subr.mxu0 0.0
  %303 = vmatpush1.msra.mxu0 0.0
  %304 = vmatprep.subr.mxu0 0.0
  %305 = vmatpush1.msra.mxu0 0.0
  %306 = vmatprep.subr.mxu0 0.0
  %307 = vmatpush1.msra.mxu0 0.0
  %308 = vmatprep.subr.mxu0 0.0
  %309 = vmatpush1.msra.mxu0 0.0
  %310 = vmatprep.subr.mxu0 0.0
  %311 = vmatpush1.msra.mxu0 0.0
  %312 = vmatprep.subr.mxu0 0.0
  %313 = vmatpush1.msra.mxu0 0.0
  %314 = vmatprep.subr.mxu0 0.0
  %315 = vmatpush1.msra.mxu0 0.0
  %316 = vmatprep.subr.mxu0 0.0
  %317 = vmatpush1.msra.mxu0 %v288
  %318 = vmatprep.subr.mxu0 0.0
  %319 = vmatpush1.msra.mxu0 %v287
  %320 = vmatprep.subr.mxu0 0.0
  %321 = vmatpush1.msra.mxu0 %v286
  %322 = vmatprep.subr.mxu0 0.0
  %323 = vmatpush1.msra.mxu0 %v285
  %324 = vmatprep.subr.mxu0 0.0
  %325 = vmatpush2.msra.mxu0 0.0
  %326 = vmatprep.subr.mxu0 0.0
  %327 = vmatpush2.msra.mxu0 0.0
  %328 = vmatprep.subr.mxu0 0.0
  %329 = vmatpush2.msra.mxu0 0.0
  %330 = vmatprep.subr.mxu0 0.0
  %331 = vmatpush2.msra.mxu0 0.0
  %332 = vmatprep.subr.mxu0 0.0
  %333 = vmatpush2.msra.mxu0 0.0
  %334 = vmatprep.subr.mxu0 0.0
  %335 = vmatpush2.msra.mxu0 0.0
  %336 = vmatprep.subr.mxu0 0.0
  %337 = vmatpush2.msra.mxu0 0.0
  %338 = vmatprep.subr.mxu0 0.0
  %339 = vmatpush2.msra.mxu0 0.0
  %340 = vmatprep.subr.mxu0 0.0
  %341 = vmatpush2.msra.mxu0 0.0
  %342 = vmatprep.subr.mxu0 0.0
  %343 = vmatpush2.msra.mxu0 0.0
  %344 = vmatprep.subr.mxu0 0.0
  %345 = vmatpush2.msra.mxu0 0.0
  %346 = vmatprep.subr.mxu0 0.0
  %347 = vmatpush2.msra.mxu0 0.0
  %348 = vmatprep.subr.mxu0 0.0
  %349 = vmatpush2.msra.mxu0 0.0
  %350 = vmatprep.subr.mxu0 0.0
  %351 = vmatpush2.msra.mxu0 0.0
  %352 = vmatprep.subr.mxu0 0.0
  %353 = vmatpush2.msra.mxu0 0.0
  %354 = vmatprep.subr.mxu0 0.0
  %355 = vmatpush2.msra.mxu0 0.0
  %356 = vmatprep.mubr.f32.mxu0 0.0
  %357 = vmatmul.mubr.f32.gmra.mxu0 %v290
  %v358 = vpop.f32.mrf.mxu0
  %v359 = vadd.f32 0.0, %v358
  %v360 = vpop.f32.mrf.mxu0
  %361 = vdwg.mxu0
  %v362 = vadd.f32 %v247, %v359
  %v363 = vtanh.pop %v362
  %v364 = vxor.u32 %v362, 2147483648
  %v365 = vmul.f32 %v364, 1.442695
  %v366 = vpow.pop %v365
  %v367 = vadd.f32 %v366, 1.0
  %v368 = vrcp.pop %v367
  %v369 = vmul.f32 1.0, %v368
  %v370 = vsel %vm135, %v363, %v369
  %v371 = vmul.f32 %v370, 0.0
  %373 = vrot.lane.b32.xlu0 %v370, 32
  %v374 = vpop.permute.xlu0 %373
  %v376 = vmul.f32 %v370, %v374
  %378 = vrot.lane.b32.xlu0 %v376, 32
  %v379 = vpop.permute.xlu0 %378
  %v381 = vadd.f32 %v371, %v379
  %v382 = vtanh.pop %v381
  %384 = vrot.lane.b32.xlu0 %v382, 32
  %v385 = vpop.permute.xlu0 %384
  %v387 = vmul.f32 %v370, %v385
  %389 = vrot.lane.b32.xlu0 %v387, 64
  %v390 = vpop.permute.xlu0 %389
  %v391 = vsel %vm155, %v390, 0
  %393 = vmatprep.subr.mxu0 0.0
  %394 = vmatpush1.msra.mxu0 0.0
  %395 = vmatprep.subr.mxu0 0.0
  %396 = vmatpush1.msra.mxu0 0.0
  %397 = vmatprep.subr.mxu0 0.0
  %398 = vmatpush1.msra.mxu0 0.0
  %399 = vmatprep.subr.mxu0 0.0
  %400 = vmatpush1.msra.mxu0 0.0
  %401 = vmatprep.subr.mxu0 0.0
  %402 = vmatpush1.msra.mxu0 0.0
  %403 = vmatprep.subr.mxu0 0.0
  %404 = vmatpush1.msra.mxu0 0.0
  %405 = vmatprep.subr.mxu0 0.0
  %406 = vmatpush1.msra.mxu0 0.0
  %407 = vmatprep.subr.mxu0 0.0
  %408 = vmatpush1.msra.mxu0 0.0
  %409 = vmatprep.subr.mxu0 0.0
  %410 = vmatpush1.msra.mxu0 0.0
  %411 = vmatprep.subr.mxu0 0.0
  %412 = vmatpush1.msra.mxu0 0.0
  %413 = vmatprep.subr.mxu0 0.0
  %414 = vmatpush1.msra.mxu0 0.0
  %415 = vmatprep.subr.mxu0 0.0
  %416 = vmatpush1.msra.mxu0 0.0
  %417 = vmatprep.subr.mxu0 0.0
  %418 = vmatpush1.msra.mxu0 %v288
  %419 = vmatprep.subr.mxu0 0.0
  %420 = vmatpush1.msra.mxu0 %v287
  %421 = vmatprep.subr.mxu0 0.0
  %422 = vmatpush1.msra.mxu0 %v286
  %423 = vmatprep.subr.mxu0 0.0
  %424 = vmatpush1.msra.mxu0 %v285
  %425 = vmatprep.subr.mxu0 0.0
  %426 = vmatpush2.msra.mxu0 0.0
  %427 = vmatprep.subr.mxu0 0.0
  %428 = vmatpush2.msra.mxu0 0.0
  %429 = vmatprep.subr.mxu0 0.0
  %430 = vmatpush2.msra.mxu0 0.0
  %431 = vmatprep.subr.mxu0 0.0
  %432 = vmatpush2.msra.mxu0 0.0
  %433 = vmatprep.subr.mxu0 0.0
  %434 = vmatpush2.msra.mxu0 0.0
  %435 = vmatprep.subr.mxu0 0.0
  %436 = vmatpush2.msra.mxu0 0.0
  %437 = vmatprep.subr.mxu0 0.0
  %438 = vmatpush2.msra.mxu0 0.0
  %439 = vmatprep.subr.mxu0 0.0
  %440 = vmatpush2.msra.mxu0 0.0
  %441 = vmatprep.subr.mxu0 0.0
  %442 = vmatpush2.msra.mxu0 0.0
  %443 = vmatprep.subr.mxu0 0.0
  %444 = vmatpush2.msra.mxu0 0.0
  %445 = vmatprep.subr.mxu0 0.0
  %446 = vmatpush2.msra.mxu0 0.0
  %447 = vmatprep.subr.mxu0 0.0
  %448 = vmatpush2.msra.mxu0 0.0
  %449 = vmatprep.subr.mxu0 0.0
  %450 = vmatpush2.msra.mxu0 0.0
  %451 = vmatprep.subr.mxu0 0.0
  %452 = vmatpush2.msra.mxu0 0.0
  %453 = vmatprep.subr.mxu0 0.0
  %454 = vmatpush2.msra.mxu0 0.0
  %455 = vmatprep.subr.mxu0 0.0
  %456 = vmatpush2.msra.mxu0 0.0
  %457 = vmatprep.mubr.f32.mxu0 0.0
  %458 = vmatmul.mubr.f32.gmra.mxu0 %v391
  %v459 = vpop.f32.mrf.mxu0
  %v460 = vadd.f32 0.0, %v459
  %v461 = vpop.f32.mrf.mxu0
  %462 = vdwg.mxu0
  %v463 = vadd.f32 %v252, %v460
  %v464 = vtanh.pop %v463
  %v465 = vxor.u32 %v463, 2147483648
  %v466 = vmul.f32 %v465, 1.442695
  %v467 = vpow.pop %v466
  %v468 = vadd.f32 %v467, 1.0
  %v469 = vrcp.pop %v468
  %v470 = vmul.f32 1.0, %v469
  %v471 = vsel %vm135, %v464, %v470
  %v472 = vmul.f32 %v471, %v381
  %474 = vrot.lane.b32.xlu0 %v471, 32
  %v475 = vpop.permute.xlu0 %474
  %v477 = vmul.f32 %v471, %v475
  %479 = vrot.lane.b32.xlu0 %v477, 32
  %v480 = vpop.permute.xlu0 %479
  %v482 = vadd.f32 %v472, %v480
  %v483 = vtanh.pop %v482
  %485 = vrot.lane.b32.xlu0 %v483, 32
  %v486 = vpop.permute.xlu0 %485
  %v488 = vmul.f32 %v471, %v486
  %490 = vrot.lane.b32.xlu0 %v488, 64
  %v491 = vpop.permute.xlu0 %490
  %v492 = vsel %vm155, %v491, 0
  %494 = vmatprep.subr.mxu0 0.0
  %495 = vmatpush1.msra.mxu0 0.0
  %496 = vmatprep.subr.mxu0 0.0
  %497 = vmatpush1.msra.mxu0 0.0
  %498 = vmatprep.subr.mxu0 0.0
  %499 = vmatpush1.msra.mxu0 0.0
  %500 = vmatprep.subr.mxu0 0.0
  %501 = vmatpush1.msra.mxu0 0.0
  %502 = vmatprep.subr.mxu0 0.0
  %503 = vmatpush1.msra.mxu0 0.0
  %504 = vmatprep.subr.mxu0 0.0
  %505 = vmatpush1.msra.mxu0 0.0
  %506 = vmatprep.subr.mxu0 0.0
  %507 = vmatpush1.msra.mxu0 0.0
  %508 = vmatprep.subr.mxu0 0.0
  %509 = vmatpush1.msra.mxu0 0.0
  %510 = vmatprep.subr.mxu0 0.0
  %511 = vmatpush1.msra.mxu0 0.0
  %512 = vmatprep.subr.mxu0 0.0
  %513 = vmatpush1.msra.mxu0 0.0
  %514 = vmatprep.subr.mxu0 0.0
  %515 = vmatpush1.msra.mxu0 0.0
  %516 = vmatprep.subr.mxu0 0.0
  %517 = vmatpush1.msra.mxu0 0.0
  %518 = vmatprep.subr.mxu0 0.0
  %519 = vmatpush1.msra.mxu0 %v288
  %520 = vmatprep.subr.mxu0 0.0
  %521 = vmatpush1.msra.mxu0 %v287
  %522 = vmatprep.subr.mxu0 0.0
  %523 = vmatpush1.msra.mxu0 %v286
  %524 = vmatprep.subr.mxu0 0.0
  %525 = vmatpush1.msra.mxu0 %v285
  %526 = vmatprep.subr.mxu0 0.0
  %527 = vmatpush2.msra.mxu0 0.0
  %528 = vmatprep.subr.mxu0 0.0
  %529 = vmatpush2.msra.mxu0 0.0
  %530 = vmatprep.subr.mxu0 0.0
  %531 = vmatpush2.msra.mxu0 0.0
  %532 = vmatprep.subr.mxu0 0.0
  %533 = vmatpush2.msra.mxu0 0.0
  %534 = vmatprep.subr.mxu0 0.0
  %535 = vmatpush2.msra.mxu0 0.0
  %536 = vmatprep.subr.mxu0 0.0
  %537 = vmatpush2.msra.mxu0 0.0
  %538 = vmatprep.subr.mxu0 0.0
  %539 = vmatpush2.msra.mxu0 0.0
  %540 = vmatprep.subr.mxu0 0.0
  %541 = vmatpush2.msra.mxu0 0.0
  %542 = vmatprep.subr.mxu0 0.0
  %543 = vmatpush2.msra.mxu0 0.0
  %544 = vmatprep.subr.mxu0 0.0
  %545 = vmatpush2.msra.mxu0 0.0
  %546 = vmatprep.subr.mxu0 0.0
  %547 = vmatpush2.msra.mxu0 0.0
  %548 = vmatprep.subr.mxu0 0.0
  %549 = vmatpush2.msra.mxu0 0.0
  %550 = vmatprep.subr.mxu0 0.0
  %551 = vmatpush2.msra.mxu0 0.0
  %552 = vmatprep.subr.mxu0 0.0
  %553 = vmatpush2.msra.mxu0 0.0
  %554 = vmatprep.subr.mxu0 0.0
  %555 = vmatpush2.msra.mxu0 0.0
  %556 = vmatprep.subr.mxu0 0.0
  %557 = vmatpush2.msra.mxu0 0.0
  %558 = vmatprep.mubr.f32.mxu0 0.0
  %559 = vmatmul.mubr.f32.gmra.mxu0 %v492
  %v560 = vpop.f32.mrf.mxu0
  %v561 = vadd.f32 0.0, %v560
  %v562 = vpop.f32.mrf.mxu0
  %563 = vdwg.mxu0
  %v564 = vadd.f32 %v257, %v561
  %v565 = vtanh.pop %v564
  %v566 = vxor.u32 %v564, 2147483648
  %v567 = vmul.f32 %v566, 1.442695
  %v568 = vpow.pop %v567
  %v569 = vadd.f32 %v568, 1.0
  %v570 = vrcp.pop %v569
  %v571 = vmul.f32 1.0, %v570
  %v572 = vsel %vm135, %v565, %v571
  %v573 = vmul.f32 %v572, %v482
  %575 = vrot.lane.b32.xlu0 %v572, 32
  %v576 = vpop.permute.xlu0 %575
  %v578 = vmul.f32 %v572, %v576
  %580 = vrot.lane.b32.xlu0 %v578, 32
  %v581 = vpop.permute.xlu0 %580
  %v583 = vadd.f32 %v573, %v581
  %v584 = vtanh.pop %v583
  %586 = vrot.lane.b32.xlu0 %v584, 32
  %v587 = vpop.permute.xlu0 %586
  %v589 = vmul.f32 %v572, %v587
  %591 = vrot.lane.b32.xlu0 %v589, 64
  %v592 = vpop.permute.xlu0 %591
  %v593 = vsel %vm155, %v592, 0
  %595 = vmatprep.subr.mxu0 0.0
  %596 = vmatpush1.msra.mxu0 0.0
  %597 = vmatprep.subr.mxu0 0.0
  %598 = vmatpush1.msra.mxu0 0.0
  %599 = vmatprep.subr.mxu0 0.0
  %600 = vmatpush1.msra.mxu0 0.0
  %601 = vmatprep.subr.mxu0 0.0
  %602 = vmatpush1.msra.mxu0 0.0
  %603 = vmatprep.subr.mxu0 0.0
  %604 = vmatpush1.msra.mxu0 0.0
  %605 = vmatprep.subr.mxu0 0.0
  %606 = vmatpush1.msra.mxu0 0.0
  %607 = vmatprep.subr.mxu0 0.0
  %608 = vmatpush1.msra.mxu0 0.0
  %609 = vmatprep.subr.mxu0 0.0
  %610 = vmatpush1.msra.mxu0 0.0
  %611 = vmatprep.subr.mxu0 0.0
  %612 = vmatpush1.msra.mxu0 0.0
  %613 = vmatprep.subr.mxu0 0.0
  %614 = vmatpush1.msra.mxu0 0.0
  %615 = vmatprep.subr.mxu0 0.0
  %616 = vmatpush1.msra.mxu0 0.0
  %617 = vmatprep.subr.mxu0 0.0
  %618 = vmatpush1.msra.mxu0 0.0
  %619 = vmatprep.subr.mxu0 0.0
  %620 = vmatpush1.msra.mxu0 %v288
  %621 = vmatprep.subr.mxu0 0.0
  %622 = vmatpush1.msra.mxu0 %v287
  %623 = vmatprep.subr.mxu0 0.0
  %624 = vmatpush1.msra.mxu0 %v286
  %625 = vmatprep.subr.mxu0 0.0
  %626 = vmatpush1.msra.mxu0 %v285
  %627 = vmatprep.subr.mxu0 0.0
  %628 = vmatpush2.msra.mxu0 0.0
  %629 = vmatprep.subr.mxu0 0.0
  %630 = vmatpush2.msra.mxu0 0.0
  %631 = vmatprep.subr.mxu0 0.0
  %632 = vmatpush2.msra.mxu0 0.0
  %633 = vmatprep.subr.mxu0 0.0
  %634 = vmatpush2.msra.mxu0 0.0
  %635 = vmatprep.subr.mxu0 0.0
  %636 = vmatpush2.msra.mxu0 0.0
  %637 = vmatprep.subr.mxu0 0.0
  %638 = vmatpush2.msra.mxu0 0.0
  %639 = vmatprep.subr.mxu0 0.0
  %640 = vmatpush2.msra.mxu0 0.0
  %641 = vmatprep.subr.mxu0 0.0
  %642 = vmatpush2.msra.mxu0 0.0
  %643 = vmatprep.subr.mxu0 0.0
  %644 = vmatpush2.msra.mxu0 0.0
  %645 = vmatprep.subr.mxu0 0.0
  %646 = vmatpush2.msra.mxu0 0.0
  %647 = vmatprep.subr.mxu0 0.0
  %648 = vmatpush2.msra.mxu0 0.0
  %649 = vmatprep.subr.mxu0 0.0
  %650 = vmatpush2.msra.mxu0 0.0
  %651 = vmatprep.subr.mxu0 0.0
  %652 = vmatpush2.msra.mxu0 0.0
  %653 = vmatprep.subr.mxu0 0.0
  %654 = vmatpush2.msra.mxu0 0.0
  %655 = vmatprep.subr.mxu0 0.0
  %656 = vmatpush2.msra.mxu0 0.0
  %657 = vmatprep.subr.mxu0 0.0
  %658 = vmatpush2.msra.mxu0 0.0
  %659 = vmatprep.mubr.f32.mxu0 0.0
  %660 = vmatmul.mubr.f32.gmra.mxu0 %v593
  %v661 = vpop.f32.mrf.mxu0
  %v662 = vadd.f32 0.0, %v661
  %v663 = vpop.f32.mrf.mxu0
  %664 = vdwg.mxu0
  %v665 = vadd.f32 %v262, %v662
  %v666 = vtanh.pop %v665
  %v667 = vxor.u32 %v665, 2147483648
  %v668 = vmul.f32 %v667, 1.442695
  %v669 = vpow.pop %v668
  %v670 = vadd.f32 %v669, 1.0
  %v671 = vrcp.pop %v670
  %v672 = vmul.f32 1.0, %v671
  %v673 = vsel %vm135, %v666, %v672
  %v674 = vmul.f32 %v673, %v583
  %676 = vrot.lane.b32.xlu0 %v673, 32
  %v677 = vpop.permute.xlu0 %676
  %v679 = vmul.f32 %v673, %v677
  %681 = vrot.lane.b32.xlu0 %v679, 32
  %v682 = vpop.permute.xlu0 %681
  %v684 = vadd.f32 %v674, %v682
  %v685 = vtanh.pop %v684
  %687 = vrot.lane.b32.xlu0 %v685, 32
  %v688 = vpop.permute.xlu0 %687
  %v690 = vmul.f32 %v673, %v688
  %692 = vrot.lane.b32.xlu0 %v690, 64
  %v693 = vpop.permute.xlu0 %692
  %v694 = vsel %vm155, %v693, 0
  %696 = vmatprep.subr.mxu0 0.0
  %697 = vmatpush1.msra.mxu0 0.0
  %698 = vmatprep.subr.mxu0 0.0
  %699 = vmatpush1.msra.mxu0 0.0
  %700 = vmatprep.subr.mxu0 0.0
  %701 = vmatpush1.msra.mxu0 0.0
  %702 = vmatprep.subr.mxu0 0.0
  %703 = vmatpush1.msra.mxu0 0.0
  %704 = vmatprep.subr.mxu0 0.0
  %705 = vmatpush1.msra.mxu0 0.0
  %706 = vmatprep.subr.mxu0 0.0
  %707 = vmatpush1.msra.mxu0 0.0
  %708 = vmatprep.subr.mxu0 0.0
  %709 = vmatpush1.msra.mxu0 0.0
  %710 = vmatprep.subr.mxu0 0.0
  %711 = vmatpush1.msra.mxu0 0.0
  %712 = vmatprep.subr.mxu0 0.0
  %713 = vmatpush1.msra.mxu0 0.0
  %714 = vmatprep.subr.mxu0 0.0
  %715 = vmatpush1.msra.mxu0 0.0
  %716 = vmatprep.subr.mxu0 0.0
  %717 = vmatpush1.msra.mxu0 0.0
  %718 = vmatprep.subr.mxu0 0.0
  %719 = vmatpush1.msra.mxu0 0.0
  %720 = vmatprep.subr.mxu0 0.0
  %721 = vmatpush1.msra.mxu0 %v288
  %722 = vmatprep.subr.mxu0 0.0
  %723 = vmatpush1.msra.mxu0 %v287
  %724 = vmatprep.subr.mxu0 0.0
  %725 = vmatpush1.msra.mxu0 %v286
  %726 = vmatprep.subr.mxu0 0.0
  %727 = vmatpush1.msra.mxu0 %v285
  %728 = vmatprep.subr.mxu0 0.0
  %729 = vmatpush2.msra.mxu0 0.0
  %730 = vmatprep.subr.mxu0 0.0
  %731 = vmatpush2.msra.mxu0 0.0
  %732 = vmatprep.subr.mxu0 0.0
  %733 = vmatpush2.msra.mxu0 0.0
  %734 = vmatprep.subr.mxu0 0.0
  %735 = vmatpush2.msra.mxu0 0.0
  %736 = vmatprep.subr.mxu0 0.0
  %737 = vmatpush2.msra.mxu0 0.0
  %738 = vmatprep.subr.mxu0 0.0
  %739 = vmatpush2.msra.mxu0 0.0
  %740 = vmatprep.subr.mxu0 0.0
  %741 = vmatpush2.msra.mxu0 0.0
  %742 = vmatprep.subr.mxu0 0.0
  %743 = vmatpush2.msra.mxu0 0.0
  %744 = vmatprep.subr.mxu0 0.0
  %745 = vmatpush2.msra.mxu0 0.0
  %746 = vmatprep.subr.mxu0 0.0
  %747 = vmatpush2.msra.mxu0 0.0
  %748 = vmatprep.subr.mxu0 0.0
  %749 = vmatpush2.msra.mxu0 0.0
  %750 = vmatprep.subr.mxu0 0.0
  %751 = vmatpush2.msra.mxu0 0.0
  %752 = vmatprep.subr.mxu0 0.0
  %753 = vmatpush2.msra.mxu0 0.0
  %754 = vmatprep.subr.mxu0 0.0
  %755 = vmatpush2.msra.mxu0 0.0
  %756 = vmatprep.subr.mxu0 0.0
  %757 = vmatpush2.msra.mxu0 0.0
  %758 = vmatprep.subr.mxu0 0.0
  %759 = vmatpush2.msra.mxu0 0.0
  %760 = vmatprep.mubr.f32.mxu0 0.0
  %761 = vmatmul.mubr.f32.gmra.mxu0 %v694
  %v762 = vpop.f32.mrf.mxu0
  %v763 = vadd.f32 0.0, %v762
  %v764 = vpop.f32.mrf.mxu0
  %765 = vdwg.mxu0
  %v766 = vadd.f32 %v267, %v763
  %v767 = vtanh.pop %v766
  %v768 = vxor.u32 %v766, 2147483648
  %v769 = vmul.f32 %v768, 1.442695
  %v770 = vpow.pop %v769
  %v771 = vadd.f32 %v770, 1.0
  %v772 = vrcp.pop %v771
  %v773 = vmul.f32 1.0, %v772
  %v774 = vsel %vm135, %v767, %v773
  %v775 = vmul.f32 %v774, %v684
  %777 = vrot.lane.b32.xlu0 %v774, 32
  %v778 = vpop.permute.xlu0 %777
  %v780 = vmul.f32 %v774, %v778
  %782 = vrot.lane.b32.xlu0 %v780, 32
  %v783 = vpop.permute.xlu0 %782
  %v785 = vadd.f32 %v775, %v783
  %v786 = vtanh.pop %v785
  %788 = vrot.lane.b32.xlu0 %v786, 32
  %v789 = vpop.permute.xlu0 %788
  %v791 = vmul.f32 %v774, %v789
  %793 = vrot.lane.b32.xlu0 %v791, 64
  %v794 = vpop.permute.xlu0 %793
  %v795 = vsel %vm155, %v794, 0
  %797 = vmatprep.subr.mxu0 0.0
  %798 = vmatpush1.msra.mxu0 0.0
  %799 = vmatprep.subr.mxu0 0.0
  %800 = vmatpush1.msra.mxu0 0.0
  %801 = vmatprep.subr.mxu0 0.0
  %802 = vmatpush1.msra.mxu0 0.0
  %803 = vmatprep.subr.mxu0 0.0
  %804 = vmatpush1.msra.mxu0 0.0
  %805 = vmatprep.subr.mxu0 0.0
  %806 = vmatpush1.msra.mxu0 0.0
  %807 = vmatprep.subr.mxu0 0.0
  %808 = vmatpush1.msra.mxu0 0.0
  %809 = vmatprep.subr.mxu0 0.0
  %810 = vmatpush1.msra.mxu0 0.0
  %811 = vmatprep.subr.mxu0 0.0
  %812 = vmatpush1.msra.mxu0 0.0
  %813 = vmatprep.subr.mxu0 0.0
  %814 = vmatpush1.msra.mxu0 0.0
  %815 = vmatprep.subr.mxu0 0.0
  %816 = vmatpush1.msra.mxu0 0.0
  %817 = vmatprep.subr.mxu0 0.0
  %818 = vmatpush1.msra.mxu0 0.0
  %819 = vmatprep.subr.mxu0 0.0
  %820 = vmatpush1.msra.mxu0 0.0
  %821 = vmatprep.subr.mxu0 0.0
  %822 = vmatpush1.msra.mxu0 %v288
  %823 = vmatprep.subr.mxu0 0.0
  %824 = vmatpush1.msra.mxu0 %v287
  %825 = vmatprep.subr.mxu0 0.0
  %826 = vmatpush1.msra.mxu0 %v286
  %827 = vmatprep.subr.mxu0 0.0
  %828 = vmatpush1.msra.mxu0 %v285
  %829 = vmatprep.subr.mxu0 0.0
  %830 = vmatpush2.msra.mxu0 0.0
  %831 = vmatprep.subr.mxu0 0.0
  %832 = vmatpush2.msra.mxu0 0.0
  %833 = vmatprep.subr.mxu0 0.0
  %834 = vmatpush2.msra.mxu0 0.0
  %835 = vmatprep.subr.mxu0 0.0
  %836 = vmatpush2.msra.mxu0 0.0
  %837 = vmatprep.subr.mxu0 0.0
  %838 = vmatpush2.msra.mxu0 0.0
  %839 = vmatprep.subr.mxu0 0.0
  %840 = vmatpush2.msra.mxu0 0.0
  %841 = vmatprep.subr.mxu0 0.0
  %842 = vmatpush2.msra.mxu0 0.0
  %843 = vmatprep.subr.mxu0 0.0
  %844 = vmatpush2.msra.mxu0 0.0
  %845 = vmatprep.subr.mxu0 0.0
  %846 = vmatpush2.msra.mxu0 0.0
  %847 = vmatprep.subr.mxu0 0.0
  %848 = vmatpush2.msra.mxu0 0.0
  %849 = vmatprep.subr.mxu0 0.0
  %850 = vmatpush2.msra.mxu0 0.0
  %851 = vmatprep.subr.mxu0 0.0
  %852 = vmatpush2.msra.mxu0 0.0
  %853 = vmatprep.subr.mxu0 0.0
  %854 = vmatpush2.msra.mxu0 0.0
  %855 = vmatprep.subr.mxu0 0.0
  %856 = vmatpush2.msra.mxu0 0.0
  %857 = vmatprep.subr.mxu0 0.0
  %858 = vmatpush2.msra.mxu0 0.0
  %859 = vmatprep.subr.mxu0 0.0
  %860 = vmatpush2.msra.mxu0 0.0
  %861 = vmatprep.mubr.f32.mxu0 0.0
  %862 = vmatmul.mubr.f32.gmra.mxu0 %v795
  %v863 = vpop.f32.mrf.mxu0
  %v864 = vadd.f32 0.0, %v863
  %v865 = vpop.f32.mrf.mxu0
  %866 = vdwg.mxu0
  %v867 = vadd.f32 %v272, %v864
  %v868 = vtanh.pop %v867
  %v869 = vxor.u32 %v867, 2147483648
  %v870 = vmul.f32 %v869, 1.442695
  %v871 = vpow.pop %v870
  %v872 = vadd.f32 %v871, 1.0
  %v873 = vrcp.pop %v872
  %v874 = vmul.f32 1.0, %v873
  %v875 = vsel %vm135, %v868, %v874
  %v876 = vmul.f32 %v875, %v785
  %878 = vrot.lane.b32.xlu0 %v875, 32
  %v879 = vpop.permute.xlu0 %878
  %v881 = vmul.f32 %v875, %v879
  %883 = vrot.lane.b32.xlu0 %v881, 32
  %v884 = vpop.permute.xlu0 %883
  %v886 = vadd.f32 %v876, %v884
  %v887 = vtanh.pop %v886
  %889 = vrot.lane.b32.xlu0 %v887, 32
  %v890 = vpop.permute.xlu0 %889
  %v892 = vmul.f32 %v875, %v890
  %894 = vrot.lane.b32.xlu0 %v892, 64
  %v895 = vpop.permute.xlu0 %894
  %v896 = vsel %vm155, %v895, 0
  %898 = vmatprep.subr.mxu0 0.0
  %899 = vmatpush1.msra.mxu0 0.0
  %900 = vmatprep.subr.mxu0 0.0
  %901 = vmatpush1.msra.mxu0 0.0
  %902 = vmatprep.subr.mxu0 0.0
  %903 = vmatpush1.msra.mxu0 0.0
  %904 = vmatprep.subr.mxu0 0.0
  %905 = vmatpush1.msra.mxu0 0.0
  %906 = vmatprep.subr.mxu0 0.0
  %907 = vmatpush1.msra.mxu0 0.0
  %908 = vmatprep.subr.mxu0 0.0
  %909 = vmatpush1.msra.mxu0 0.0
  %910 = vmatprep.subr.mxu0 0.0
  %911 = vmatpush1.msra.mxu0 0.0
  %912 = vmatprep.subr.mxu0 0.0
  %913 = vmatpush1.msra.mxu0 0.0
  %914 = vmatprep.subr.mxu0 0.0
  %915 = vmatpush1.msra.mxu0 0.0
  %916 = vmatprep.subr.mxu0 0.0
  %917 = vmatpush1.msra.mxu0 0.0
  %918 = vmatprep.subr.mxu0 0.0
  %919 = vmatpush1.msra.mxu0 0.0
  %920 = vmatprep.subr.mxu0 0.0
  %921 = vmatpush1.msra.mxu0 0.0
  %922 = vmatprep.subr.mxu0 0.0
  %923 = vmatpush1.msra.mxu0 %v288
  %924 = vmatprep.subr.mxu0 0.0
  %925 = vmatpush1.msra.mxu0 %v287
  %926 = vmatprep.subr.mxu0 0.0
  %927 = vmatpush1.msra.mxu0 %v286
  %928 = vmatprep.subr.mxu0 0.0
  %929 = vmatpush1.msra.mxu0 %v285
  %930 = vmatprep.subr.mxu0 0.0
  %931 = vmatpush2.msra.mxu0 0.0
  %932 = vmatprep.subr.mxu0 0.0
  %933 = vmatpush2.msra.mxu0 0.0
  %934 = vmatprep.subr.mxu0 0.0
  %935 = vmatpush2.msra.mxu0 0.0
  %936 = vmatprep.subr.mxu0 0.0
  %937 = vmatpush2.msra.mxu0 0.0
  %938 = vmatprep.subr.mxu0 0.0
  %939 = vmatpush2.msra.mxu0 0.0
  %940 = vmatprep.subr.mxu0 0.0
  %941 = vmatpush2.msra.mxu0 0.0
  %942 = vmatprep.subr.mxu0 0.0
  %943 = vmatpush2.msra.mxu0 0.0
  %944 = vmatprep.subr.mxu0 0.0
  %945 = vmatpush2.msra.mxu0 0.0
  %946 = vmatprep.subr.mxu0 0.0
  %947 = vmatpush2.msra.mxu0 0.0
  %948 = vmatprep.subr.mxu0 0.0
  %949 = vmatpush2.msra.mxu0 0.0
  %950 = vmatprep.subr.mxu0 0.0
  %951 = vmatpush2.msra.mxu0 0.0
  %952 = vmatprep.subr.mxu0 0.0
  %953 = vmatpush2.msra.mxu0 0.0
  %954 = vmatprep.subr.mxu0 0.0
  %955 = vmatpush2.msra.mxu0 0.0
  %956 = vmatprep.subr.mxu0 0.0
  %957 = vmatpush2.msra.mxu0 0.0
  %958 = vmatprep.subr.mxu0 0.0
  %959 = vmatpush2.msra.mxu0 0.0
  %960 = vmatprep.subr.mxu0 0.0
  %961 = vmatpush2.msra.mxu0 0.0
  %962 = vmatprep.mubr.f32.mxu0 0.0
  %963 = vmatmul.mubr.f32.gmra.mxu0 %v896
  %v964 = vpop.f32.mrf.mxu0
  %v965 = vadd.f32 0.0, %v964
  %v966 = vpop.f32.mrf.mxu0
  %967 = vdwg.mxu0
  %v968 = vadd.f32 %v277, %v965
  %v969 = vtanh.pop %v968
  %v970 = vxor.u32 %v968, 2147483648
  %v971 = vmul.f32 %v970, 1.442695
  %v972 = vpow.pop %v971
  %v973 = vadd.f32 %v972, 1.0
  %v974 = vrcp.pop %v973
  %v975 = vmul.f32 1.0, %v974
  %v976 = vsel %vm135, %v969, %v975
  %v977 = vmul.f32 %v976, %v886
  %979 = vrot.lane.b32.xlu0 %v976, 32
  %v980 = vpop.permute.xlu0 %979
  %v982 = vmul.f32 %v976, %v980
  %984 = vrot.lane.b32.xlu0 %v982, 32
  %v985 = vpop.permute.xlu0 %984
  %v987 = vadd.f32 %v977, %v985
  %v988 = vtanh.pop %v987
  %990 = vrot.lane.b32.xlu0 %v988, 32
  %v991 = vpop.permute.xlu0 %990
  %v993 = vmul.f32 %v976, %v991
  %995 = vrot.lane.b32.xlu0 %v993, 64
  %v996 = vpop.permute.xlu0 %995
  %v997 = vsel %vm155, %v996, 0
  %999 = vmatprep.subr.mxu0 0.0
  %1000 = vmatpush1.msra.mxu0 0.0
  %1001 = vmatprep.subr.mxu0 0.0
  %1002 = vmatpush1.msra.mxu0 0.0
  %1003 = vmatprep.subr.mxu0 0.0
  %1004 = vmatpush1.msra.mxu0 0.0
  %1005 = vmatprep.subr.mxu0 0.0
  %1006 = vmatpush1.msra.mxu0 0.0
  %1007 = vmatprep.subr.mxu0 0.0
  %1008 = vmatpush1.msra.mxu0 0.0
  %1009 = vmatprep.subr.mxu0 0.0
  %1010 = vmatpush1.msra.mxu0 0.0
  %1011 = vmatprep.subr.mxu0 0.0
  %1012 = vmatpush1.msra.mxu0 0.0
  %1013 = vmatprep.subr.mxu0 0.0
  %1014 = vmatpush1.msra.mxu0 0.0
  %1015 = vmatprep.subr.mxu0 0.0
  %1016 = vmatpush1.msra.mxu0 0.0
  %1017 = vmatprep.subr.mxu0 0.0
  %1018 = vmatpush1.msra.mxu0 0.0
  %1019 = vmatprep.subr.mxu0 0.0
  %1020 = vmatpush1.msra.mxu0 0.0
  %1021 = vmatprep.subr.mxu0 0.0
  %1022 = vmatpush1.msra.mxu0 0.0
  %1023 = vmatprep.subr.mxu0 0.0
  %1024 = vmatpush1.msra.mxu0 %v288
  %1025 = vmatprep.subr.mxu0 0.0
  %1026 = vmatpush1.msra.mxu0 %v287
  %1027 = vmatprep.subr.mxu0 0.0
  %1028 = vmatpush1.msra.mxu0 %v286
  %1029 = vmatprep.subr.mxu0 0.0
  %1030 = vmatpush1.msra.mxu0 %v285
  %1031 = vmatprep.subr.mxu0 0.0
  %1032 = vmatpush2.msra.mxu0 0.0
  %1033 = vmatprep.subr.mxu0 0.0
  %1034 = vmatpush2.msra.mxu0 0.0
  %1035 = vmatprep.subr.mxu0 0.0
  %1036 = vmatpush2.msra.mxu0 0.0
  %1037 = vmatprep.subr.mxu0 0.0
  %1038 = vmatpush2.msra.mxu0 0.0
  %1039 = vmatprep.subr.mxu0 0.0
  %1040 = vmatpush2.msra.mxu0 0.0
  %1041 = vmatprep.subr.mxu0 0.0
  %1042 = vmatpush2.msra.mxu0 0.0
  %1043 = vmatprep.subr.mxu0 0.0
  %1044 = vmatpush2.msra.mxu0 0.0
  %1045 = vmatprep.subr.mxu0 0.0
  %1046 = vmatpush2.msra.mxu0 0.0
  %1047 = vmatprep.subr.mxu0 0.0
  %1048 = vmatpush2.msra.mxu0 0.0
  %1049 = vmatprep.subr.mxu0 0.0
  %1050 = vmatpush2.msra.mxu0 0.0
  %1051 = vmatprep.subr.mxu0 0.0
  %1052 = vmatpush2.msra.mxu0 0.0
  %1053 = vmatprep.subr.mxu0 0.0
  %1054 = vmatpush2.msra.mxu0 0.0
  %1055 = vmatprep.subr.mxu0 0.0
  %1056 = vmatpush2.msra.mxu0 0.0
  %1057 = vmatprep.subr.mxu0 0.0
  %1058 = vmatpush2.msra.mxu0 0.0
  %1059 = vmatprep.subr.mxu0 0.0
  %1060 = vmatpush2.msra.mxu0 0.0
  %1061 = vmatprep.subr.mxu0 0.0
  %1062 = vmatpush2.msra.mxu0 0.0
  %1063 = vmatprep.mubr.f32.mxu0 0.0
  %1064 = vmatmul.mubr.f32.gmra.mxu0 %v997
  %v1065 = vpop.f32.mrf.mxu0
  %v1066 = vadd.f32 0.0, %v1065
  %v1067 = vpop.f32.mrf.mxu0
  %1068 = vdwg.mxu0
  %v1069 = vadd.f32 %v282, %v1066
  %v1070 = vtanh.pop %v1069
  %v1071 = vxor.u32 %v1069, 2147483648
  %v1072 = vmul.f32 %v1071, 1.442695
  %v1073 = vpow.pop %v1072
  %v1074 = vadd.f32 %v1073, 1.0
  %v1075 = vrcp.pop %v1074
  %v1076 = vmul.f32 1.0, %v1075
  %v1077 = vsel %vm135, %v1070, %v1076
  %v1078 = vmul.f32 %v1077, %v987
  %1080 = vrot.lane.b32.xlu0 %v1077, 32
  %v1081 = vpop.permute.xlu0 %1080
  %v1083 = vmul.f32 %v1077, %v1081
  %1085 = vrot.lane.b32.xlu0 %v1083, 32
  %v1086 = vpop.permute.xlu0 %1085
  %v1088 = vadd.f32 %v1078, %v1086
  %v1089 = vtanh.pop %v1088
  %1091 = vrot.lane.b32.xlu0 %v1089, 32
  %v1092 = vpop.permute.xlu0 %1091
  %v1094 = vmul.f32 %v1077, %v1092
  %s1095 = smul.u32 1, 32
  %s1096 = smul.u32 %s1095, 1
  %s1097 = sshll.u32 %s1096, 4
  %1098 = dma.done [#allocation4], %s1097
  %s1099 = sshll.u32 %s1096, 4
  %1100 = dma.done %s83, %s1099
  %v1101 = vld [vmem:[#allocation2] sm:$0xff]
  %v1102 = vld [vmem:[#allocation2 + $0x8] sm:$0xff]
  %v1103 = vld [vmem:[#allocation2 + $0x10] sm:$0xff]
  %v1104 = vld [vmem:[#allocation2 + $0x18] sm:$0xff]
  %v1105 = vld [vmem:[%s6] sm:$0x1]
  %v1107 = vlaneseq
  %v1108 = vshrl.u32 %v1107, 7
  %v1109 = vsub.s32 0, %v1108
  %v1110 = vrot.slane %v1105, %v1109
  %1113 = vrot.lane.b32.xlu0 %v1094, 64
  %v1114 = vpop.permute.xlu0 %1113
  %v1115 = vsel %vm155, %v1114, 0
  %1117 = vmatprep.subr.mxu0 0.0
  %1118 = vmatpush1.msra.mxu0 0.0
  %1119 = vmatprep.subr.mxu0 0.0
  %1120 = vmatpush1.msra.mxu0 0.0
  %1121 = vmatprep.subr.mxu0 0.0
  %1122 = vmatpush1.msra.mxu0 0.0
  %1123 = vmatprep.subr.mxu0 0.0
  %1124 = vmatpush1.msra.mxu0 0.0
  %1125 = vmatprep.subr.mxu0 0.0
  %1126 = vmatpush1.msra.mxu0 0.0
  %1127 = vmatprep.subr.mxu0 0.0
  %1128 = vmatpush1.msra.mxu0 0.0
  %1129 = vmatprep.subr.mxu0 0.0
  %1130 = vmatpush1.msra.mxu0 0.0
  %1131 = vmatprep.subr.mxu0 0.0
  %1132 = vmatpush1.msra.mxu0 0.0
  %1133 = vmatprep.subr.mxu0 0.0
  %1134 = vmatpush1.msra.mxu0 0.0
  %1135 = vmatprep.subr.mxu0 0.0
  %1136 = vmatpush1.msra.mxu0 0.0
  %1137 = vmatprep.subr.mxu0 0.0
  %1138 = vmatpush1.msra.mxu0 0.0
  %1139 = vmatprep.subr.mxu0 0.0
  %1140 = vmatpush1.msra.mxu0 0.0
  %1141 = vmatprep.subr.mxu0 0.0
  %1142 = vmatpush1.msra.mxu0 %v1104
  %1143 = vmatprep.subr.mxu0 0.0
  %1144 = vmatpush1.msra.mxu0 %v1103
  %1145 = vmatprep.subr.mxu0 0.0
  %1146 = vmatpush1.msra.mxu0 %v1102
  %1147 = vmatprep.subr.mxu0 0.0
  %1148 = vmatpush1.msra.mxu0 %v1101
  %1149 = vmatprep.subr.mxu0 0.0
  %1150 = vmatpush2.msra.mxu0 0.0
  %1151 = vmatprep.subr.mxu0 0.0
  %1152 = vmatpush2.msra.mxu0 0.0
  %1153 = vmatprep.subr.mxu0 0.0
  %1154 = vmatpush2.msra.mxu0 0.0
  %1155 = vmatprep.subr.mxu0 0.0
  %1156 = vmatpush2.msra.mxu0 0.0
  %1157 = vmatprep.subr.mxu0 0.0
  %1158 = vmatpush2.msra.mxu0 0.0
  %1159 = vmatprep.subr.mxu0 0.0
  %1160 = vmatpush2.msra.mxu0 0.0
  %1161 = vmatprep.subr.mxu0 0.0
  %1162 = vmatpush2.msra.mxu0 0.0
  %1163 = vmatprep.subr.mxu0 0.0
  %1164 = vmatpush2.msra.mxu0 0.0
  %1165 = vmatprep.subr.mxu0 0.0
  %1166 = vmatpush2.msra.mxu0 0.0
  %1167 = vmatprep.subr.mxu0 0.0
  %1168 = vmatpush2.msra.mxu0 0.0
  %1169 = vmatprep.subr.mxu0 0.0
  %1170 = vmatpush2.msra.mxu0 0.0
  %1171 = vmatprep.subr.mxu0 0.0
  %1172 = vmatpush2.msra.mxu0 0.0
  %1173 = vmatprep.subr.mxu0 0.0
  %1174 = vmatpush2.msra.mxu0 0.0
  %1175 = vmatprep.subr.mxu0 0.0
  %1176 = vmatpush2.msra.mxu0 0.0
  %1177 = vmatprep.subr.mxu0 0.0
  %1178 = vmatpush2.msra.mxu0 0.0
  %1179 = vmatprep.subr.mxu0 0.0
  %1180 = vmatpush2.msra.mxu0 0.0
  %1181 = vmatprep.mubr.f32.mxu0 0.0
  %1182 = vmatmul.mubr.f32.gmra.mxu0 %v391
  %v1183 = vpop.f32.mrf.mxu0
  %v1184 = vadd.f32 %v1110, %v1183
  %v1185 = vpop.f32.mrf.mxu0
  %1186 = vmatprep.mubr.f32.mxu0 0.0
  %1187 = vmatmul.mubr.f32.gmra.mxu0 %v492
  %v1188 = vpop.f32.mrf.mxu0
  %v1189 = vadd.f32 %v1110, %v1188
  %v1190 = vpop.f32.mrf.mxu0
  %1191 = vmatprep.mubr.f32.mxu0 0.0
  %1192 = vmatmul.mubr.f32.gmra.mxu0 %v593
  %v1193 = vpop.f32.mrf.mxu0
  %v1194 = vadd.f32 %v1110, %v1193
  %v1195 = vpop.f32.mrf.mxu0
  %1196 = vmatprep.mubr.f32.mxu0 0.0
  %1197 = vmatmul.mubr.f32.gmra.mxu0 %v694
  %v1198 = vpop.f32.mrf.mxu0
  %v1199 = vadd.f32 %v1110, %v1198
  %v1200 = vpop.f32.mrf.mxu0
  %1201 = vmatprep.mubr.f32.mxu0 0.0
  %1202 = vmatmul.mubr.f32.gmra.mxu0 %v795
  %v1203 = vpop.f32.mrf.mxu0
  %v1204 = vadd.f32 %v1110, %v1203
  %v1205 = vpop.f32.mrf.mxu0
  %1206 = vmatprep.mubr.f32.mxu0 0.0
  %1207 = vmatmul.mubr.f32.gmra.mxu0 %v896
  %v1208 = vpop.f32.mrf.mxu0
  %v1209 = vadd.f32 %v1110, %v1208
  %v1210 = vpop.f32.mrf.mxu0
  %1211 = vmatprep.mubr.f32.mxu0 0.0
  %1212 = vmatmul.mubr.f32.gmra.mxu0 %v997
  %v1213 = vpop.f32.mrf.mxu0
  %v1214 = vadd.f32 %v1110, %v1213
  %v1215 = vpop.f32.mrf.mxu0
  %1216 = vmatprep.mubr.f32.mxu0 0.0
  %1217 = vmatmul.mubr.f32.gmra.mxu0 %v1115
  %v1218 = vpop.f32.mrf.mxu0
  %v1219 = vadd.f32 %v1110, %v1218
  %v1220 = vpop.f32.mrf.mxu0
  %1221 = vdwg.mxu0
  %v1222 = vld [vmem:[#allocation3] sm:$0xff]
  %v1223 = vld [vmem:[#allocation3 + $0x8] sm:$0xff]
  %v1224 = vld [vmem:[#allocation3 + $0x10] sm:$0xff]
  %v1225 = vld [vmem:[#allocation3 + $0x18] sm:$0xff]
  %1226 = vmatprep.subr.mxu0 0.0
  %1227 = vmatpush1.msra.mxu0 0.0
  %1228 = vmatprep.subr.mxu0 0.0
  %1229 = vmatpush1.msra.mxu0 0.0
  %1230 = vmatprep.subr.mxu0 0.0
  %1231 = vmatpush1.msra.mxu0 0.0
  %1232 = vmatprep.subr.mxu0 0.0
  %1233 = vmatpush1.msra.mxu0 0.0
  %1234 = vmatprep.subr.mxu0 0.0
  %1235 = vmatpush1.msra.mxu0 0.0
  %1236 = vmatprep.subr.mxu0 0.0
  %1237 = vmatpush1.msra.mxu0 0.0
  %1238 = vmatprep.subr.mxu0 0.0
  %1239 = vmatpush1.msra.mxu0 0.0
  %1240 = vmatprep.subr.mxu0 0.0
  %1241 = vmatpush1.msra.mxu0 0.0
  %1242 = vmatprep.subr.mxu0 0.0
  %1243 = vmatpush1.msra.mxu0 0.0
  %1244 = vmatprep.subr.mxu0 0.0
  %1245 = vmatpush1.msra.mxu0 0.0
  %1246 = vmatprep.subr.mxu0 0.0
  %1247 = vmatpush1.msra.mxu0 0.0
  %1248 = vmatprep.subr.mxu0 0.0
  %1249 = vmatpush1.msra.mxu0 0.0
  %1250 = vmatprep.subr.mxu0 0.0
  %1251 = vmatpush1.msra.mxu0 %v1225
  %1252 = vmatprep.subr.mxu0 0.0
  %1253 = vmatpush1.msra.mxu0 %v1224
  %1254 = vmatprep.subr.mxu0 0.0
  %1255 = vmatpush1.msra.mxu0 %v1223
  %1256 = vmatprep.subr.mxu0 0.0
  %1257 = vmatpush1.msra.mxu0 %v1222
  %1258 = vmatprep.subr.mxu0 0.0
  %1259 = vmatpush2.msra.mxu0 0.0
  %1260 = vmatprep.subr.mxu0 0.0
  %1261 = vmatpush2.msra.mxu0 0.0
  %1262 = vmatprep.subr.mxu0 0.0
  %1263 = vmatpush2.msra.mxu0 0.0
  %1264 = vmatprep.subr.mxu0 0.0
  %1265 = vmatpush2.msra.mxu0 0.0
  %1266 = vmatprep.subr.mxu0 0.0
  %1267 = vmatpush2.msra.mxu0 0.0
  %1268 = vmatprep.subr.mxu0 0.0
  %1269 = vmatpush2.msra.mxu0 0.0
  %1270 = vmatprep.subr.mxu0 0.0
  %1271 = vmatpush2.msra.mxu0 0.0
  %1272 = vmatprep.subr.mxu0 0.0
  %1273 = vmatpush2.msra.mxu0 0.0
  %1274 = vmatprep.subr.mxu0 0.0
  %1275 = vmatpush2.msra.mxu0 0.0
  %1276 = vmatprep.subr.mxu0 0.0
  %1277 = vmatpush2.msra.mxu0 0.0
  %1278 = vmatprep.subr.mxu0 0.0
  %1279 = vmatpush2.msra.mxu0 0.0
  %1280 = vmatprep.subr.mxu0 0.0
  %1281 = vmatpush2.msra.mxu0 0.0
  %1282 = vmatprep.subr.mxu0 0.0
  %1283 = vmatpush2.msra.mxu0 0.0
  %1284 = vmatprep.subr.mxu0 0.0
  %1285 = vmatpush2.msra.mxu0 0.0
  %1286 = vmatprep.subr.mxu0 0.0
  %1287 = vmatpush2.msra.mxu0 0.0
  %1288 = vmatprep.subr.mxu0 0.0
  %1289 = vmatpush2.msra.mxu0 0.0
  %1290 = vmatprep.mubr.f32.mxu0 0.0
  %1291 = vmatmul.mubr.f32.gmra.mxu0 %v290
  %v1292 = vpop.f32.mrf.mxu0
  %v1293 = vadd.f32 0.0, %v1292
  %v1294 = vpop.f32.mrf.mxu0
  %1295 = vdwg.mxu0
  %v1296 = vadd.f32 %v1184, %v1293
  %v1297 = vtanh.pop %v1296
  %v1298 = vxor.u32 %v1296, 2147483648
  %v1299 = vmul.f32 %v1298, 1.442695
  %v1300 = vpow.pop %v1299
  %v1301 = vadd.f32 %v1300, 1.0
  %v1302 = vrcp.pop %v1301
  %v1303 = vmul.f32 1.0, %v1302
  %v1304 = vsel %vm135, %v1297, %v1303
  %v1305 = vmul.f32 %v1304, 0.0
  %1307 = vrot.lane.b32.xlu0 %v1304, 32
  %v1308 = vpop.permute.xlu0 %1307
  %v1310 = vmul.f32 %v1304, %v1308
  %1312 = vrot.lane.b32.xlu0 %v1310, 32
  %v1313 = vpop.permute.xlu0 %1312
  %v1315 = vadd.f32 %v1305, %v1313
  %v1316 = vtanh.pop %v1315
  %1318 = vrot.lane.b32.xlu0 %v1316, 32
  %v1319 = vpop.permute.xlu0 %1318
  %v1321 = vmul.f32 %v1304, %v1319
  %1323 = vrot.lane.b32.xlu0 %v1321, 64
  %v1324 = vpop.permute.xlu0 %1323
  %v1325 = vsel %vm155, %v1324, 0
  %1327 = vmatprep.subr.mxu0 0.0
  %1328 = vmatpush1.msra.mxu0 0.0
  %1329 = vmatprep.subr.mxu0 0.0
  %1330 = vmatpush1.msra.mxu0 0.0
  %1331 = vmatprep.subr.mxu0 0.0
  %1332 = vmatpush1.msra.mxu0 0.0
  %1333 = vmatprep.subr.mxu0 0.0
  %1334 = vmatpush1.msra.mxu0 0.0
  %1335 = vmatprep.subr.mxu0 0.0
  %1336 = vmatpush1.msra.mxu0 0.0
  %1337 = vmatprep.subr.mxu0 0.0
  %1338 = vmatpush1.msra.mxu0 0.0
  %1339 = vmatprep.subr.mxu0 0.0
  %1340 = vmatpush1.msra.mxu0 0.0
  %1341 = vmatprep.subr.mxu0 0.0
  %1342 = vmatpush1.msra.mxu0 0.0
  %1343 = vmatprep.subr.mxu0 0.0
  %1344 = vmatpush1.msra.mxu0 0.0
  %1345 = vmatprep.subr.mxu0 0.0
  %1346 = vmatpush1.msra.mxu0 0.0
  %1347 = vmatprep.subr.mxu0 0.0
  %1348 = vmatpush1.msra.mxu0 0.0
  %1349 = vmatprep.subr.mxu0 0.0
  %1350 = vmatpush1.msra.mxu0 0.0
  %1351 = vmatprep.subr.mxu0 0.0
  %1352 = vmatpush1.msra.mxu0 %v1225
  %1353 = vmatprep.subr.mxu0 0.0
  %1354 = vmatpush1.msra.mxu0 %v1224
  %1355 = vmatprep.subr.mxu0 0.0
  %1356 = vmatpush1.msra.mxu0 %v1223
  %1357 = vmatprep.subr.mxu0 0.0
  %1358 = vmatpush1.msra.mxu0 %v1222
  %1359 = vmatprep.subr.mxu0 0.0
  %1360 = vmatpush2.msra.mxu0 0.0
  %1361 = vmatprep.subr.mxu0 0.0
  %1362 = vmatpush2.msra.mxu0 0.0
  %1363 = vmatprep.subr.mxu0 0.0
  %1364 = vmatpush2.msra.mxu0 0.0
  %1365 = vmatprep.subr.mxu0 0.0
  %1366 = vmatpush2.msra.mxu0 0.0
  %1367 = vmatprep.subr.mxu0 0.0
  %1368 = vmatpush2.msra.mxu0 0.0
  %1369 = vmatprep.subr.mxu0 0.0
  %1370 = vmatpush2.msra.mxu0 0.0
  %1371 = vmatprep.subr.mxu0 0.0
  %1372 = vmatpush2.msra.mxu0 0.0
  %1373 = vmatprep.subr.mxu0 0.0
  %1374 = vmatpush2.msra.mxu0 0.0
  %1375 = vmatprep.subr.mxu0 0.0
  %1376 = vmatpush2.msra.mxu0 0.0
  %1377 = vmatprep.subr.mxu0 0.0
  %1378 = vmatpush2.msra.mxu0 0.0
  %1379 = vmatprep.subr.mxu0 0.0
  %1380 = vmatpush2.msra.mxu0 0.0
  %1381 = vmatprep.subr.mxu0 0.0
  %1382 = vmatpush2.msra.mxu0 0.0
  %1383 = vmatprep.subr.mxu0 0.0
  %1384 = vmatpush2.msra.mxu0 0.0
  %1385 = vmatprep.subr.mxu0 0.0
  %1386 = vmatpush2.msra.mxu0 0.0
  %1387 = vmatprep.subr.mxu0 0.0
  %1388 = vmatpush2.msra.mxu0 0.0
  %1389 = vmatprep.subr.mxu0 0.0
  %1390 = vmatpush2.msra.mxu0 0.0
  %1391 = vmatprep.mubr.f32.mxu0 0.0
  %1392 = vmatmul.mubr.f32.gmra.mxu0 %v1325
  %v1393 = vpop.f32.mrf.mxu0
  %v1394 = vadd.f32 0.0, %v1393
  %v1395 = vpop.f32.mrf.mxu0
  %1396 = vdwg.mxu0
  %v1397 = vadd.f32 %v1189, %v1394
  %v1398 = vtanh.pop %v1397
  %v1399 = vxor.u32 %v1397, 2147483648
  %v1400 = vmul.f32 %v1399, 1.442695
  %v1401 = vpow.pop %v1400
  %v1402 = vadd.f32 %v1401, 1.0
  %v1403 = vrcp.pop %v1402
  %v1404 = vmul.f32 1.0, %v1403
  %v1405 = vsel %vm135, %v1398, %v1404
  %v1406 = vmul.f32 %v1405, %v1315
  %1408 = vrot.lane.b32.xlu0 %v1405, 32
  %v1409 = vpop.permute.xlu0 %1408
  %v1411 = vmul.f32 %v1405, %v1409
  %1413 = vrot.lane.b32.xlu0 %v1411, 32
  %v1414 = vpop.permute.xlu0 %1413
  %v1416 = vadd.f32 %v1406, %v1414
  %v1417 = vtanh.pop %v1416
  %1419 = vrot.lane.b32.xlu0 %v1417, 32
  %v1420 = vpop.permute.xlu0 %1419
  %v1422 = vmul.f32 %v1405, %v1420
  %1424 = vrot.lane.b32.xlu0 %v1422, 64
  %v1425 = vpop.permute.xlu0 %1424
  %v1426 = vsel %vm155, %v1425, 0
  %1428 = vmatprep.subr.mxu0 0.0
  %1429 = vmatpush1.msra.mxu0 0.0
  %1430 = vmatprep.subr.mxu0 0.0
  %1431 = vmatpush1.msra.mxu0 0.0
  %1432 = vmatprep.subr.mxu0 0.0
  %1433 = vmatpush1.msra.mxu0 0.0
  %1434 = vmatprep.subr.mxu0 0.0
  %1435 = vmatpush1.msra.mxu0 0.0
  %1436 = vmatprep.subr.mxu0 0.0
  %1437 = vmatpush1.msra.mxu0 0.0
  %1438 = vmatprep.subr.mxu0 0.0
  %1439 = vmatpush1.msra.mxu0 0.0
  %1440 = vmatprep.subr.mxu0 0.0
  %1441 = vmatpush1.msra.mxu0 0.0
  %1442 = vmatprep.subr.mxu0 0.0
  %1443 = vmatpush1.msra.mxu0 0.0
  %1444 = vmatprep.subr.mxu0 0.0
  %1445 = vmatpush1.msra.mxu0 0.0
  %1446 = vmatprep.subr.mxu0 0.0
  %1447 = vmatpush1.msra.mxu0 0.0
  %1448 = vmatprep.subr.mxu0 0.0
  %1449 = vmatpush1.msra.mxu0 0.0
  %1450 = vmatprep.subr.mxu0 0.0
  %1451 = vmatpush1.msra.mxu0 0.0
  %1452 = vmatprep.subr.mxu0 0.0
  %1453 = vmatpush1.msra.mxu0 %v1225
  %1454 = vmatprep.subr.mxu0 0.0
  %1455 = vmatpush1.msra.mxu0 %v1224
  %1456 = vmatprep.subr.mxu0 0.0
  %1457 = vmatpush1.msra.mxu0 %v1223
  %1458 = vmatprep.subr.mxu0 0.0
  %1459 = vmatpush1.msra.mxu0 %v1222
  %1460 = vmatprep.subr.mxu0 0.0
  %1461 = vmatpush2.msra.mxu0 0.0
  %1462 = vmatprep.subr.mxu0 0.0
  %1463 = vmatpush2.msra.mxu0 0.0
  %1464 = vmatprep.subr.mxu0 0.0
  %1465 = vmatpush2.msra.mxu0 0.0
  %1466 = vmatprep.subr.mxu0 0.0
  %1467 = vmatpush2.msra.mxu0 0.0
  %1468 = vmatprep.subr.mxu0 0.0
  %1469 = vmatpush2.msra.mxu0 0.0
  %1470 = vmatprep.subr.mxu0 0.0
  %1471 = vmatpush2.msra.mxu0 0.0
  %1472 = vmatprep.subr.mxu0 0.0
  %1473 = vmatpush2.msra.mxu0 0.0
  %1474 = vmatprep.subr.mxu0 0.0
  %1475 = vmatpush2.msra.mxu0 0.0
  %1476 = vmatprep.subr.mxu0 0.0
  %1477 = vmatpush2.msra.mxu0 0.0
  %1478 = vmatprep.subr.mxu0 0.0
  %1479 = vmatpush2.msra.mxu0 0.0
  %1480 = vmatprep.subr.mxu0 0.0
  %1481 = vmatpush2.msra.mxu0 0.0
  %1482 = vmatprep.subr.mxu0 0.0
  %1483 = vmatpush2.msra.mxu0 0.0
  %1484 = vmatprep.subr.mxu0 0.0
  %1485 = vmatpush2.msra.mxu0 0.0
  %1486 = vmatprep.subr.mxu0 0.0
  %1487 = vmatpush2.msra.mxu0 0.0
  %1488 = vmatprep.subr.mxu0 0.0
  %1489 = vmatpush2.msra.mxu0 0.0
  %1490 = vmatprep.subr.mxu0 0.0
  %1491 = vmatpush2.msra.mxu0 0.0
  %1492 = vmatprep.mubr.f32.mxu0 0.0
  %1493 = vmatmul.mubr.f32.gmra.mxu0 %v1426
  %v1494 = vpop.f32.mrf.mxu0
  %v1495 = vadd.f32 0.0, %v1494
  %v1496 = vpop.f32.mrf.mxu0
  %1497 = vdwg.mxu0
  %v1498 = vadd.f32 %v1194, %v1495
  %v1499 = vtanh.pop %v1498
  %v1500 = vxor.u32 %v1498, 2147483648
  %v1501 = vmul.f32 %v1500, 1.442695
  %v1502 = vpow.pop %v1501
  %v1503 = vadd.f32 %v1502, 1.0
  %v1504 = vrcp.pop %v1503
  %v1505 = vmul.f32 1.0, %v1504
  %v1506 = vsel %vm135, %v1499, %v1505
  %v1507 = vmul.f32 %v1506, %v1416
  %1509 = vrot.lane.b32.xlu0 %v1506, 32
  %v1510 = vpop.permute.xlu0 %1509
  %v1512 = vmul.f32 %v1506, %v1510
  %1514 = vrot.lane.b32.xlu0 %v1512, 32
  %v1515 = vpop.permute.xlu0 %1514
  %v1517 = vadd.f32 %v1507, %v1515
  %v1518 = vtanh.pop %v1517
  %1520 = vrot.lane.b32.xlu0 %v1518, 32
  %v1521 = vpop.permute.xlu0 %1520
  %v1523 = vmul.f32 %v1506, %v1521
  %1525 = vrot.lane.b32.xlu0 %v1523, 64
  %v1526 = vpop.permute.xlu0 %1525
  %v1527 = vsel %vm155, %v1526, 0
  %1529 = vmatprep.subr.mxu0 0.0
  %1530 = vmatpush1.msra.mxu0 0.0
  %1531 = vmatprep.subr.mxu0 0.0
  %1532 = vmatpush1.msra.mxu0 0.0
  %1533 = vmatprep.subr.mxu0 0.0
  %1534 = vmatpush1.msra.mxu0 0.0
  %1535 = vmatprep.subr.mxu0 0.0
  %1536 = vmatpush1.msra.mxu0 0.0
  %1537 = vmatprep.subr.mxu0 0.0
  %1538 = vmatpush1.msra.mxu0 0.0
  %1539 = vmatprep.subr.mxu0 0.0
  %1540 = vmatpush1.msra.mxu0 0.0
  %1541 = vmatprep.subr.mxu0 0.0
  %1542 = vmatpush1.msra.mxu0 0.0
  %1543 = vmatprep.subr.mxu0 0.0
  %1544 = vmatpush1.msra.mxu0 0.0
  %1545 = vmatprep.subr.mxu0 0.0
  %1546 = vmatpush1.msra.mxu0 0.0
  %1547 = vmatprep.subr.mxu0 0.0
  %1548 = vmatpush1.msra.mxu0 0.0
  %1549 = vmatprep.subr.mxu0 0.0
  %1550 = vmatpush1.msra.mxu0 0.0
  %1551 = vmatprep.subr.mxu0 0.0
  %1552 = vmatpush1.msra.mxu0 0.0
  %1553 = vmatprep.subr.mxu0 0.0
  %1554 = vmatpush1.msra.mxu0 %v1225
  %1555 = vmatprep.subr.mxu0 0.0
  %1556 = vmatpush1.msra.mxu0 %v1224
  %1557 = vmatprep.subr.mxu0 0.0
  %1558 = vmatpush1.msra.mxu0 %v1223
  %1559 = vmatprep.subr.mxu0 0.0
  %1560 = vmatpush1.msra.mxu0 %v1222
  %1561 = vmatprep.subr.mxu0 0.0
  %1562 = vmatpush2.msra.mxu0 0.0
  %1563 = vmatprep.subr.mxu0 0.0
  %1564 = vmatpush2.msra.mxu0 0.0
  %1565 = vmatprep.subr.mxu0 0.0
  %1566 = vmatpush2.msra.mxu0 0.0
  %1567 = vmatprep.subr.mxu0 0.0
  %1568 = vmatpush2.msra.mxu0 0.0
  %1569 = vmatprep.subr.mxu0 0.0
  %1570 = vmatpush2.msra.mxu0 0.0
  %1571 = vmatprep.subr.mxu0 0.0
  %1572 = vmatpush2.msra.mxu0 0.0
  %1573 = vmatprep.subr.mxu0 0.0
  %1574 = vmatpush2.msra.mxu0 0.0
  %1575 = vmatprep.subr.mxu0 0.0
  %1576 = vmatpush2.msra.mxu0 0.0
  %1577 = vmatprep.subr.mxu0 0.0
  %1578 = vmatpush2.msra.mxu0 0.0
  %1579 = vmatprep.subr.mxu0 0.0
  %1580 = vmatpush2.msra.mxu0 0.0
  %1581 = vmatprep.subr.mxu0 0.0
  %1582 = vmatpush2.msra.mxu0 0.0
  %1583 = vmatprep.subr.mxu0 0.0
  %1584 = vmatpush2.msra.mxu0 0.0
  %1585 = vmatprep.subr.mxu0 0.0
  %1586 = vmatpush2.msra.mxu0 0.0
  %1587 = vmatprep.subr.mxu0 0.0
  %1588 = vmatpush2.msra.mxu0 0.0
  %1589 = vmatprep.subr.mxu0 0.0
  %1590 = vmatpush2.msra.mxu0 0.0
  %1591 = vmatprep.subr.mxu0 0.0
  %1592 = vmatpush2.msra.mxu0 0.0
  %1593 = vmatprep.mubr.f32.mxu0 0.0
  %1594 = vmatmul.mubr.f32.gmra.mxu0 %v1527
  %v1595 = vpop.f32.mrf.mxu0
  %v1596 = vadd.f32 0.0, %v1595
  %v1597 = vpop.f32.mrf.mxu0
  %1598 = vdwg.mxu0
  %v1599 = vadd.f32 %v1199, %v1596
  %v1600 = vtanh.pop %v1599
  %v1601 = vxor.u32 %v1599, 2147483648
  %v1602 = vmul.f32 %v1601, 1.442695
  %v1603 = vpow.pop %v1602
  %v1604 = vadd.f32 %v1603, 1.0
  %v1605 = vrcp.pop %v1604
  %v1606 = vmul.f32 1.0, %v1605
  %v1607 = vsel %vm135, %v1600, %v1606
  %v1608 = vmul.f32 %v1607, %v1517
  %1610 = vrot.lane.b32.xlu0 %v1607, 32
  %v1611 = vpop.permute.xlu0 %1610
  %v1613 = vmul.f32 %v1607, %v1611
  %1615 = vrot.lane.b32.xlu0 %v1613, 32
  %v1616 = vpop.permute.xlu0 %1615
  %v1618 = vadd.f32 %v1608, %v1616
  %v1619 = vtanh.pop %v1618
  %1621 = vrot.lane.b32.xlu0 %v1619, 32
  %v1622 = vpop.permute.xlu0 %1621
  %v1624 = vmul.f32 %v1607, %v1622
  %1626 = vrot.lane.b32.xlu0 %v1624, 64
  %v1627 = vpop.permute.xlu0 %1626
  %v1628 = vsel %vm155, %v1627, 0
  %1630 = vmatprep.subr.mxu0 0.0
  %1631 = vmatpush1.msra.mxu0 0.0
  %1632 = vmatprep.subr.mxu0 0.0
  %1633 = vmatpush1.msra.mxu0 0.0
  %1634 = vmatprep.subr.mxu0 0.0
  %1635 = vmatpush1.msra.mxu0 0.0
  %1636 = vmatprep.subr.mxu0 0.0
  %1637 = vmatpush1.msra.mxu0 0.0
  %1638 = vmatprep.subr.mxu0 0.0
  %1639 = vmatpush1.msra.mxu0 0.0
  %1640 = vmatprep.subr.mxu0 0.0
  %1641 = vmatpush1.msra.mxu0 0.0
  %1642 = vmatprep.subr.mxu0 0.0
  %1643 = vmatpush1.msra.mxu0 0.0
  %1644 = vmatprep.subr.mxu0 0.0
  %1645 = vmatpush1.msra.mxu0 0.0
  %1646 = vmatprep.subr.mxu0 0.0
  %1647 = vmatpush1.msra.mxu0 0.0
  %1648 = vmatprep.subr.mxu0 0.0
  %1649 = vmatpush1.msra.mxu0 0.0
  %1650 = vmatprep.subr.mxu0 0.0
  %1651 = vmatpush1.msra.mxu0 0.0
  %1652 = vmatprep.subr.mxu0 0.0
  %1653 = vmatpush1.msra.mxu0 0.0
  %1654 = vmatprep.subr.mxu0 0.0
  %1655 = vmatpush1.msra.mxu0 %v1225
  %1656 = vmatprep.subr.mxu0 0.0
  %1657 = vmatpush1.msra.mxu0 %v1224
  %1658 = vmatprep.subr.mxu0 0.0
  %1659 = vmatpush1.msra.mxu0 %v1223
  %1660 = vmatprep.subr.mxu0 0.0
  %1661 = vmatpush1.msra.mxu0 %v1222
  %1662 = vmatprep.subr.mxu0 0.0
  %1663 = vmatpush2.msra.mxu0 0.0
  %1664 = vmatprep.subr.mxu0 0.0
  %1665 = vmatpush2.msra.mxu0 0.0
  %1666 = vmatprep.subr.mxu0 0.0
  %1667 = vmatpush2.msra.mxu0 0.0
  %1668 = vmatprep.subr.mxu0 0.0
  %1669 = vmatpush2.msra.mxu0 0.0
  %1670 = vmatprep.subr.mxu0 0.0
  %1671 = vmatpush2.msra.mxu0 0.0
  %1672 = vmatprep.subr.mxu0 0.0
  %1673 = vmatpush2.msra.mxu0 0.0
  %1674 = vmatprep.subr.mxu0 0.0
  %1675 = vmatpush2.msra.mxu0 0.0
  %1676 = vmatprep.subr.mxu0 0.0
  %1677 = vmatpush2.msra.mxu0 0.0
  %1678 = vmatprep.subr.mxu0 0.0
  %1679 = vmatpush2.msra.mxu0 0.0
  %1680 = vmatprep.subr.mxu0 0.0
  %1681 = vmatpush2.msra.mxu0 0.0
  %1682 = vmatprep.subr.mxu0 0.0
  %1683 = vmatpush2.msra.mxu0 0.0
  %1684 = vmatprep.subr.mxu0 0.0
  %1685 = vmatpush2.msra.mxu0 0.0
  %1686 = vmatprep.subr.mxu0 0.0
  %1687 = vmatpush2.msra.mxu0 0.0
  %1688 = vmatprep.subr.mxu0 0.0
  %1689 = vmatpush2.msra.mxu0 0.0
  %1690 = vmatprep.subr.mxu0 0.0
  %1691 = vmatpush2.msra.mxu0 0.0
  %1692 = vmatprep.subr.mxu0 0.0
  %1693 = vmatpush2.msra.mxu0 0.0
  %1694 = vmatprep.mubr.f32.mxu0 0.0
  %1695 = vmatmul.mubr.f32.gmra.mxu0 %v1628
  %v1696 = vpop.f32.mrf.mxu0
  %v1697 = vadd.f32 0.0, %v1696
  %v1698 = vpop.f32.mrf.mxu0
  %1699 = vdwg.mxu0
  %v1700 = vadd.f32 %v1204, %v1697
  %v1701 = vtanh.pop %v1700
  %v1702 = vxor.u32 %v1700, 2147483648
  %v1703 = vmul.f32 %v1702, 1.442695
  %v1704 = vpow.pop %v1703
  %v1705 = vadd.f32 %v1704, 1.0
  %v1706 = vrcp.pop %v1705
  %v1707 = vmul.f32 1.0, %v1706
  %v1708 = vsel %vm135, %v1701, %v1707
  %v1709 = vmul.f32 %v1708, %v1618
  %1711 = vrot.lane.b32.xlu0 %v1708, 32
  %v1712 = vpop.permute.xlu0 %1711
  %v1714 = vmul.f32 %v1708, %v1712
  %1716 = vrot.lane.b32.xlu0 %v1714, 32
  %v1717 = vpop.permute.xlu0 %1716
  %v1719 = vadd.f32 %v1709, %v1717
  %v1720 = vtanh.pop %v1719
  %1722 = vrot.lane.b32.xlu0 %v1720, 32
  %v1723 = vpop.permute.xlu0 %1722
  %v1725 = vmul.f32 %v1708, %v1723
  %1727 = vrot.lane.b32.xlu0 %v1725, 64
  %v1728 = vpop.permute.xlu0 %1727
  %v1729 = vsel %vm155, %v1728, 0
  %1731 = vmatprep.subr.mxu0 0.0
  %1732 = vmatpush1.msra.mxu0 0.0
  %1733 = vmatprep.subr.mxu0 0.0
  %1734 = vmatpush1.msra.mxu0 0.0
  %1735 = vmatprep.subr.mxu0 0.0
  %1736 = vmatpush1.msra.mxu0 0.0
  %1737 = vmatprep.subr.mxu0 0.0
  %1738 = vmatpush1.msra.mxu0 0.0
  %1739 = vmatprep.subr.mxu0 0.0
  %1740 = vmatpush1.msra.mxu0 0.0
  %1741 = vmatprep.subr.mxu0 0.0
  %1742 = vmatpush1.msra.mxu0 0.0
  %1743 = vmatprep.subr.mxu0 0.0
  %1744 = vmatpush1.msra.mxu0 0.0
  %1745 = vmatprep.subr.mxu0 0.0
  %1746 = vmatpush1.msra.mxu0 0.0
  %1747 = vmatprep.subr.mxu0 0.0
  %1748 = vmatpush1.msra.mxu0 0.0
  %1749 = vmatprep.subr.mxu0 0.0
  %1750 = vmatpush1.msra.mxu0 0.0
  %1751 = vmatprep.subr.mxu0 0.0
  %1752 = vmatpush1.msra.mxu0 0.0
  %1753 = vmatprep.subr.mxu0 0.0
  %1754 = vmatpush1.msra.mxu0 0.0
  %1755 = vmatprep.subr.mxu0 0.0
  %1756 = vmatpush1.msra.mxu0 %v1225
  %1757 = vmatprep.subr.mxu0 0.0
  %1758 = vmatpush1.msra.mxu0 %v1224
  %1759 = vmatprep.subr.mxu0 0.0
  %1760 = vmatpush1.msra.mxu0 %v1223
  %1761 = vmatprep.subr.mxu0 0.0
  %1762 = vmatpush1.msra.mxu0 %v1222
  %1763 = vmatprep.subr.mxu0 0.0
  %1764 = vmatpush2.msra.mxu0 0.0
  %1765 = vmatprep.subr.mxu0 0.0
  %1766 = vmatpush2.msra.mxu0 0.0
  %1767 = vmatprep.subr.mxu0 0.0
  %1768 = vmatpush2.msra.mxu0 0.0
  %1769 = vmatprep.subr.mxu0 0.0
  %1770 = vmatpush2.msra.mxu0 0.0
  %1771 = vmatprep.subr.mxu0 0.0
  %1772 = vmatpush2.msra.mxu0 0.0
  %1773 = vmatprep.subr.mxu0 0.0
  %1774 = vmatpush2.msra.mxu0 0.0
  %1775 = vmatprep.subr.mxu0 0.0
  %1776 = vmatpush2.msra.mxu0 0.0
  %1777 = vmatprep.subr.mxu0 0.0
  %1778 = vmatpush2.msra.mxu0 0.0
  %1779 = vmatprep.subr.mxu0 0.0
  %1780 = vmatpush2.msra.mxu0 0.0
  %1781 = vmatprep.subr.mxu0 0.0
  %1782 = vmatpush2.msra.mxu0 0.0
  %1783 = vmatprep.subr.mxu0 0.0
  %1784 = vmatpush2.msra.mxu0 0.0
  %1785 = vmatprep.subr.mxu0 0.0
  %1786 = vmatpush2.msra.mxu0 0.0
  %1787 = vmatprep.subr.mxu0 0.0
  %1788 = vmatpush2.msra.mxu0 0.0
  %1789 = vmatprep.subr.mxu0 0.0
  %1790 = vmatpush2.msra.mxu0 0.0
  %1791 = vmatprep.subr.mxu0 0.0
  %1792 = vmatpush2.msra.mxu0 0.0
  %1793 = vmatprep.subr.mxu0 0.0
  %1794 = vmatpush2.msra.mxu0 0.0
  %1795 = vmatprep.mubr.f32.mxu0 0.0
  %1796 = vmatmul.mubr.f32.gmra.mxu0 %v1729
  %v1797 = vpop.f32.mrf.mxu0
  %v1798 = vadd.f32 0.0, %v1797
  %v1799 = vpop.f32.mrf.mxu0
  %1800 = vdwg.mxu0
  %v1801 = vadd.f32 %v1209, %v1798
  %v1802 = vtanh.pop %v1801
  %v1803 = vxor.u32 %v1801, 2147483648
  %v1804 = vmul.f32 %v1803, 1.442695
  %v1805 = vpow.pop %v1804
  %v1806 = vadd.f32 %v1805, 1.0
  %v1807 = vrcp.pop %v1806
  %v1808 = vmul.f32 1.0, %v1807
  %v1809 = vsel %vm135, %v1802, %v1808
  %v1810 = vmul.f32 %v1809, %v1719
  %1812 = vrot.lane.b32.xlu0 %v1809, 32
  %v1813 = vpop.permute.xlu0 %1812
  %v1815 = vmul.f32 %v1809, %v1813
  %1817 = vrot.lane.b32.xlu0 %v1815, 32
  %v1818 = vpop.permute.xlu0 %1817
  %v1820 = vadd.f32 %v1810, %v1818
  %v1821 = vtanh.pop %v1820
  %1823 = vrot.lane.b32.xlu0 %v1821, 32
  %v1824 = vpop.permute.xlu0 %1823
  %v1826 = vmul.f32 %v1809, %v1824
  %1828 = vrot.lane.b32.xlu0 %v1826, 64
  %v1829 = vpop.permute.xlu0 %1828
  %v1830 = vsel %vm155, %v1829, 0
  %1832 = vmatprep.subr.mxu0 0.0
  %1833 = vmatpush1.msra.mxu0 0.0
  %1834 = vmatprep.subr.mxu0 0.0
  %1835 = vmatpush1.msra.mxu0 0.0
  %1836 = vmatprep.subr.mxu0 0.0
  %1837 = vmatpush1.msra.mxu0 0.0
  %1838 = vmatprep.subr.mxu0 0.0
  %1839 = vmatpush1.msra.mxu0 0.0
  %1840 = vmatprep.subr.mxu0 0.0
  %1841 = vmatpush1.msra.mxu0 0.0
  %1842 = vmatprep.subr.mxu0 0.0
  %1843 = vmatpush1.msra.mxu0 0.0
  %1844 = vmatprep.subr.mxu0 0.0
  %1845 = vmatpush1.msra.mxu0 0.0
  %1846 = vmatprep.subr.mxu0 0.0
  %1847 = vmatpush1.msra.mxu0 0.0
  %1848 = vmatprep.subr.mxu0 0.0
  %1849 = vmatpush1.msra.mxu0 0.0
  %1850 = vmatprep.subr.mxu0 0.0
  %1851 = vmatpush1.msra.mxu0 0.0
  %1852 = vmatprep.subr.mxu0 0.0
  %1853 = vmatpush1.msra.mxu0 0.0
  %1854 = vmatprep.subr.mxu0 0.0
  %1855 = vmatpush1.msra.mxu0 0.0
  %1856 = vmatprep.subr.mxu0 0.0
  %1857 = vmatpush1.msra.mxu0 %v1225
  %1858 = vmatprep.subr.mxu0 0.0
  %1859 = vmatpush1.msra.mxu0 %v1224
  %1860 = vmatprep.subr.mxu0 0.0
  %1861 = vmatpush1.msra.mxu0 %v1223
  %1862 = vmatprep.subr.mxu0 0.0
  %1863 = vmatpush1.msra.mxu0 %v1222
  %1864 = vmatprep.subr.mxu0 0.0
  %1865 = vmatpush2.msra.mxu0 0.0
  %1866 = vmatprep.subr.mxu0 0.0
  %1867 = vmatpush2.msra.mxu0 0.0
  %1868 = vmatprep.subr.mxu0 0.0
  %1869 = vmatpush2.msra.mxu0 0.0
  %1870 = vmatprep.subr.mxu0 0.0
  %1871 = vmatpush2.msra.mxu0 0.0
  %1872 = vmatprep.subr.mxu0 0.0
  %1873 = vmatpush2.msra.mxu0 0.0
  %1874 = vmatprep.subr.mxu0 0.0
  %1875 = vmatpush2.msra.mxu0 0.0
  %1876 = vmatprep.subr.mxu0 0.0
  %1877 = vmatpush2.msra.mxu0 0.0
  %1878 = vmatprep.subr.mxu0 0.0
  %1879 = vmatpush2.msra.mxu0 0.0
  %1880 = vmatprep.subr.mxu0 0.0
  %1881 = vmatpush2.msra.mxu0 0.0
  %1882 = vmatprep.subr.mxu0 0.0
  %1883 = vmatpush2.msra.mxu0 0.0
  %1884 = vmatprep.subr.mxu0 0.0
  %1885 = vmatpush2.msra.mxu0 0.0
  %1886 = vmatprep.subr.mxu0 0.0
  %1887 = vmatpush2.msra.mxu0 0.0
  %1888 = vmatprep.subr.mxu0 0.0
  %1889 = vmatpush2.msra.mxu0 0.0
  %1890 = vmatprep.subr.mxu0 0.0
  %1891 = vmatpush2.msra.mxu0 0.0
  %1892 = vmatprep.subr.mxu0 0.0
  %1893 = vmatpush2.msra.mxu0 0.0
  %1894 = vmatprep.subr.mxu0 0.0
  %1895 = vmatpush2.msra.mxu0 0.0
  %1896 = vmatprep.mubr.f32.mxu0 0.0
  %1897 = vmatmul.mubr.f32.gmra.mxu0 %v1830
  %v1898 = vpop.f32.mrf.mxu0
  %v1899 = vadd.f32 0.0, %v1898
  %v1900 = vpop.f32.mrf.mxu0
  %1901 = vdwg.mxu0
  %v1902 = vadd.f32 %v1214, %v1899
  %v1903 = vtanh.pop %v1902
  %v1904 = vxor.u32 %v1902, 2147483648
  %v1905 = vmul.f32 %v1904, 1.442695
  %v1906 = vpow.pop %v1905
  %v1907 = vadd.f32 %v1906, 1.0
  %v1908 = vrcp.pop %v1907
  %v1909 = vmul.f32 1.0, %v1908
  %v1910 = vsel %vm135, %v1903, %v1909
  %v1911 = vmul.f32 %v1910, %v1820
  %1913 = vrot.lane.b32.xlu0 %v1910, 32
  %v1914 = vpop.permute.xlu0 %1913
  %v1916 = vmul.f32 %v1910, %v1914
  %1918 = vrot.lane.b32.xlu0 %v1916, 32
  %v1919 = vpop.permute.xlu0 %1918
  %v1921 = vadd.f32 %v1911, %v1919
  %v1922 = vtanh.pop %v1921
  %1924 = vrot.lane.b32.xlu0 %v1922, 32
  %v1925 = vpop.permute.xlu0 %1924
  %v1927 = vmul.f32 %v1910, %v1925
  %1929 = vrot.lane.b32.xlu0 %v1927, 64
  %v1930 = vpop.permute.xlu0 %1929
  %v1931 = vsel %vm155, %v1930, 0
  %1933 = vmatprep.subr.mxu0 0.0
  %1934 = vmatpush1.msra.mxu0 0.0
  %1935 = vmatprep.subr.mxu0 0.0
  %1936 = vmatpush1.msra.mxu0 0.0
  %1937 = vmatprep.subr.mxu0 0.0
  %1938 = vmatpush1.msra.mxu0 0.0
  %1939 = vmatprep.subr.mxu0 0.0
  %1940 = vmatpush1.msra.mxu0 0.0
  %1941 = vmatprep.subr.mxu0 0.0
  %1942 = vmatpush1.msra.mxu0 0.0
  %1943 = vmatprep.subr.mxu0 0.0
  %1944 = vmatpush1.msra.mxu0 0.0
  %1945 = vmatprep.subr.mxu0 0.0
  %1946 = vmatpush1.msra.mxu0 0.0
  %1947 = vmatprep.subr.mxu0 0.0
  %1948 = vmatpush1.msra.mxu0 0.0
  %1949 = vmatprep.subr.mxu0 0.0
  %1950 = vmatpush1.msra.mxu0 0.0
  %1951 = vmatprep.subr.mxu0 0.0
  %1952 = vmatpush1.msra.mxu0 0.0
  %1953 = vmatprep.subr.mxu0 0.0
  %1954 = vmatpush1.msra.mxu0 0.0
  %1955 = vmatprep.subr.mxu0 0.0
  %1956 = vmatpush1.msra.mxu0 0.0
  %1957 = vmatprep.subr.mxu0 0.0
  %1958 = vmatpush1.msra.mxu0 %v1225
  %1959 = vmatprep.subr.mxu0 0.0
  %1960 = vmatpush1.msra.mxu0 %v1224
  %1961 = vmatprep.subr.mxu0 0.0
  %1962 = vmatpush1.msra.mxu0 %v1223
  %1963 = vmatprep.subr.mxu0 0.0
  %1964 = vmatpush1.msra.mxu0 %v1222
  %1965 = vmatprep.subr.mxu0 0.0
  %1966 = vmatpush2.msra.mxu0 0.0
  %1967 = vmatprep.subr.mxu0 0.0
  %1968 = vmatpush2.msra.mxu0 0.0
  %1969 = vmatprep.subr.mxu0 0.0
  %1970 = vmatpush2.msra.mxu0 0.0
  %1971 = vmatprep.subr.mxu0 0.0
  %1972 = vmatpush2.msra.mxu0 0.0
  %1973 = vmatprep.subr.mxu0 0.0
  %1974 = vmatpush2.msra.mxu0 0.0
  %1975 = vmatprep.subr.mxu0 0.0
  %1976 = vmatpush2.msra.mxu0 0.0
  %1977 = vmatprep.subr.mxu0 0.0
  %1978 = vmatpush2.msra.mxu0 0.0
  %1979 = vmatprep.subr.mxu0 0.0
  %1980 = vmatpush2.msra.mxu0 0.0
  %1981 = vmatprep.subr.mxu0 0.0
  %1982 = vmatpush2.msra.mxu0 0.0
  %1983 = vmatprep.subr.mxu0 0.0
  %1984 = vmatpush2.msra.mxu0 0.0
  %1985 = vmatprep.subr.mxu0 0.0
  %1986 = vmatpush2.msra.mxu0 0.0
  %1987 = vmatprep.subr.mxu0 0.0
  %1988 = vmatpush2.msra.mxu0 0.0
  %1989 = vmatprep.subr.mxu0 0.0
  %1990 = vmatpush2.msra.mxu0 0.0
  %1991 = vmatprep.subr.mxu0 0.0
  %1992 = vmatpush2.msra.mxu0 0.0
  %1993 = vmatprep.subr.mxu0 0.0
  %1994 = vmatpush2.msra.mxu0 0.0
  %1995 = vmatprep.subr.mxu0 0.0
  %1996 = vmatpush2.msra.mxu0 0.0
  %1997 = vmatprep.mubr.f32.mxu0 0.0
  %1998 = vmatmul.mubr.f32.gmra.mxu0 %v1931
  %v1999 = vpop.f32.mrf.mxu0
  %v2000 = vadd.f32 0.0, %v1999
  %v2001 = vpop.f32.mrf.mxu0
  %2002 = vdwg.mxu0
  %v2003 = vadd.f32 %v1219, %v2000
  %v2004 = vtanh.pop %v2003
  %v2005 = vxor.u32 %v2003, 2147483648
  %v2006 = vmul.f32 %v2005, 1.442695
  %v2007 = vpow.pop %v2006
  %v2008 = vadd.f32 %v2007, 1.0
  %v2009 = vrcp.pop %v2008
  %v2010 = vmul.f32 1.0, %v2009
  %v2011 = vsel %vm135, %v2004, %v2010
  %v2012 = vmul.f32 %v2011, %v1921
  %2014 = vrot.lane.b32.xlu0 %v2011, 32
  %v2015 = vpop.permute.xlu0 %2014
  %v2017 = vmul.f32 %v2011, %v2015
  %2019 = vrot.lane.b32.xlu0 %v2017, 32
  %v2020 = vpop.permute.xlu0 %2019
  %v2022 = vadd.f32 %v2012, %v2020
  %v2023 = vtanh.pop %v2022
  %2025 = vrot.lane.b32.xlu0 %v2023, 32
  %v2026 = vpop.permute.xlu0 %2025
  %v2028 = vmul.f32 %v2011, %v2026
  %v2029 = vld [vmem:[%s7] sm:$0xff]
  %v2030 = vld [vmem:[%s7 + $0x8] sm:$0xff]
  %v2031 = vld [vmem:[%s7 + $0x10] sm:$0xff]
  %v2032 = vld [vmem:[%s7 + $0x18] sm:$0xff]
  %v2033 = vld [vmem:[%s8] sm:$0x1]
  %v2035 = vlaneseq
  %v2036 = vshrl.u32 %v2035, 7
  %v2037 = vsub.s32 0, %v2036
  %v2038 = vrot.slane %v2033, %v2037
  %2041 = vrot.lane.b32.xlu0 %v2028, 64
  %v2042 = vpop.permute.xlu0 %2041
  %v2043 = vsel %vm155, %v2042, 0
  %2045 = vmatprep.subr.mxu0 0.0
  %2046 = vmatpush1.msra.mxu0 0.0
  %2047 = vmatprep.subr.mxu0 0.0
  %2048 = vmatpush1.msra.mxu0 0.0
  %2049 = vmatprep.subr.mxu0 0.0
  %2050 = vmatpush1.msra.mxu0 0.0
  %2051 = vmatprep.subr.mxu0 0.0
  %2052 = vmatpush1.msra.mxu0 0.0
  %2053 = vmatprep.subr.mxu0 0.0
  %2054 = vmatpush1.msra.mxu0 0.0
  %2055 = vmatprep.subr.mxu0 0.0
  %2056 = vmatpush1.msra.mxu0 0.0
  %2057 = vmatprep.subr.mxu0 0.0
  %2058 = vmatpush1.msra.mxu0 0.0
  %2059 = vmatprep.subr.mxu0 0.0
  %2060 = vmatpush1.msra.mxu0 0.0
  %2061 = vmatprep.subr.mxu0 0.0
  %2062 = vmatpush1.msra.mxu0 0.0
  %2063 = vmatprep.subr.mxu0 0.0
  %2064 = vmatpush1.msra.mxu0 0.0
  %2065 = vmatprep.subr.mxu0 0.0
  %2066 = vmatpush1.msra.mxu0 0.0
  %2067 = vmatprep.subr.mxu0 0.0
  %2068 = vmatpush1.msra.mxu0 0.0
  %2069 = vmatprep.subr.mxu0 0.0
  %2070 = vmatpush1.msra.mxu0 %v2032
  %2071 = vmatprep.subr.mxu0 0.0
  %2072 = vmatpush1.msra.mxu0 %v2031
  %2073 = vmatprep.subr.mxu0 0.0
  %2074 = vmatpush1.msra.mxu0 %v2030
  %2075 = vmatprep.subr.mxu0 0.0
  %2076 = vmatpush1.msra.mxu0 %v2029
  %2077 = vmatprep.subr.mxu0 0.0
  %2078 = vmatpush2.msra.mxu0 0.0
  %2079 = vmatprep.subr.mxu0 0.0
  %2080 = vmatpush2.msra.mxu0 0.0
  %2081 = vmatprep.subr.mxu0 0.0
  %2082 = vmatpush2.msra.mxu0 0.0
  %2083 = vmatprep.subr.mxu0 0.0
  %2084 = vmatpush2.msra.mxu0 0.0
  %2085 = vmatprep.subr.mxu0 0.0
  %2086 = vmatpush2.msra.mxu0 0.0
  %2087 = vmatprep.subr.mxu0 0.0
  %2088 = vmatpush2.msra.mxu0 0.0
  %2089 = vmatprep.subr.mxu0 0.0
  %2090 = vmatpush2.msra.mxu0 0.0
  %2091 = vmatprep.subr.mxu0 0.0
  %2092 = vmatpush2.msra.mxu0 0.0
  %2093 = vmatprep.subr.mxu0 0.0
  %2094 = vmatpush2.msra.mxu0 0.0
  %2095 = vmatprep.subr.mxu0 0.0
  %2096 = vmatpush2.msra.mxu0 0.0
  %2097 = vmatprep.subr.mxu0 0.0
  %2098 = vmatpush2.msra.mxu0 0.0
  %2099 = vmatprep.subr.mxu0 0.0
  %2100 = vmatpush2.msra.mxu0 0.0
  %2101 = vmatprep.subr.mxu0 0.0
  %2102 = vmatpush2.msra.mxu0 0.0
  %2103 = vmatprep.subr.mxu0 0.0
  %2104 = vmatpush2.msra.mxu0 0.0
  %2105 = vmatprep.subr.mxu0 0.0
  %2106 = vmatpush2.msra.mxu0 0.0
  %2107 = vmatprep.subr.mxu0 0.0
  %2108 = vmatpush2.msra.mxu0 0.0
  %2109 = vmatprep.mubr.f32.mxu0 0.0
  %2110 = vmatmul.mubr.f32.gmra.mxu0 %v2043
  %v2111 = vpop.f32.mrf.mxu0
  %v2112 = vadd.f32 %v2038, %v2111
  %v2113 = vpop.f32.mrf.mxu0
  %2114 = vdwg.mxu0
  %v2115 = vmax.f32 %v2112, 0.0
  %v2116 = vld [vmem:[%s9] sm:$0xff]
  %v2117 = vld [vmem:[%s9 + $0x8] sm:$0xff]
  %v2118 = vld [vmem:[%s10] sm:$0x1]
  %v2120 = vlaneseq
  %v2121 = vshrl.u32 %v2120, 7
  %v2122 = vsub.s32 0, %v2121
  %v2123 = vrot.slane %v2118, %v2122
  %vm2125 = vcmask 130048
  %v2127 = vsel %vm2125, %v2115, 0
  %2129 = vmatprep.subr.mxu0 0.0
  %2130 = vmatpush1.msra.mxu0 0.0
  %2131 = vmatprep.subr.mxu0 0.0
  %2132 = vmatpush1.msra.mxu0 0.0
  %2133 = vmatprep.subr.mxu0 0.0
  %2134 = vmatpush1.msra.mxu0 0.0
  %2135 = vmatprep.subr.mxu0 0.0
  %2136 = vmatpush1.msra.mxu0 0.0
  %2137 = vmatprep.subr.mxu0 0.0
  %2138 = vmatpush1.msra.mxu0 0.0
  %2139 = vmatprep.subr.mxu0 0.0
  %2140 = vmatpush1.msra.mxu0 0.0
  %2141 = vmatprep.subr.mxu0 0.0
  %2142 = vmatpush1.msra.mxu0 0.0
  %2143 = vmatprep.subr.mxu0 0.0
  %2144 = vmatpush1.msra.mxu0 0.0
  %2145 = vmatprep.subr.mxu0 0.0
  %2146 = vmatpush1.msra.mxu0 0.0
  %2147 = vmatprep.subr.mxu0 0.0
  %2148 = vmatpush1.msra.mxu0 0.0
  %2149 = vmatprep.subr.mxu0 0.0
  %2150 = vmatpush1.msra.mxu0 0.0
  %2151 = vmatprep.subr.mxu0 0.0
  %2152 = vmatpush1.msra.mxu0 0.0
  %2153 = vmatprep.subr.mxu0 0.0
  %2154 = vmatpush1.msra.mxu0 0.0
  %2155 = vmatprep.subr.mxu0 0.0
  %2156 = vmatpush1.msra.mxu0 0.0
  %2157 = vmatprep.subr.mxu0 0.0
  %2158 = vmatpush1.msra.mxu0 %v2117
  %2159 = vmatprep.subr.mxu0 0.0
  %2160 = vmatpush1.msra.mxu0 %v2116
  %2161 = vmatprep.subr.mxu0 0.0
  %2162 = vmatpush2.msra.mxu0 0.0
  %2163 = vmatprep.subr.mxu0 0.0
  %2164 = vmatpush2.msra.mxu0 0.0
  %2165 = vmatprep.subr.mxu0 0.0
  %2166 = vmatpush2.msra.mxu0 0.0
  %2167 = vmatprep.subr.mxu0 0.0
  %2168 = vmatpush2.msra.mxu0 0.0
  %2169 = vmatprep.subr.mxu0 0.0
  %2170 = vmatpush2.msra.mxu0 0.0
  %2171 = vmatprep.subr.mxu0 0.0
  %2172 = vmatpush2.msra.mxu0 0.0
  %2173 = vmatprep.subr.mxu0 0.0
  %2174 = vmatpush2.msra.mxu0 0.0
  %2175 = vmatprep.subr.mxu0 0.0
  %2176 = vmatpush2.msra.mxu0 0.0
  %2177 = vmatprep.subr.mxu0 0.0
  %2178 = vmatpush2.msra.mxu0 0.0
  %2179 = vmatprep.subr.mxu0 0.0
  %2180 = vmatpush2.msra.mxu0 0.0
  %2181 = vmatprep.subr.mxu0 0.0
  %2182 = vmatpush2.msra.mxu0 0.0
  %2183 = vmatprep.subr.mxu0 0.0
  %2184 = vmatpush2.msra.mxu0 0.0
  %2185 = vmatprep.subr.mxu0 0.0
  %2186 = vmatpush2.msra.mxu0 0.0
  %2187 = vmatprep.subr.mxu0 0.0
  %2188 = vmatpush2.msra.mxu0 0.0
  %2189 = vmatprep.subr.mxu0 0.0
  %2190 = vmatpush2.msra.mxu0 0.0
  %2191 = vmatprep.subr.mxu0 0.0
  %2192 = vmatpush2.msra.mxu0 0.0
  %2193 = vmatprep.mubr.f32.mxu0 0.0
  %2194 = vmatmul.mubr.f32.gmra.mxu0 %v2127
  %v2195 = vpop.f32.mrf.mxu0
  %v2196 = vadd.f32 %v2123, %v2195
  %v2197 = vpop.f32.mrf.mxu0
  %2198 = vdwg.mxu0
  %2199 = vst [vmem:[%s11] sm:$0xff] %v2196
  // Predicated region
  $region106: #{lstm_forward.1} parent=0 // pred_check
    _
  $region107: #{lstm_forward.1} parent=0 // pred_check_branch
    %2201 = sbr.rel (0) target = $region109
  $region108: #{lstm_forward.1} parent=0 // pred_region
    _
  $region109: #{lstm_forward.1} parent=0 // pred_fallthru
    _
  // Predicated region
  $region110: #{lstm_forward.1} parent=0 // pred_check
    _
  $region111: #{lstm_forward.1} parent=0 // pred_check_branch
    %2203 = sbr.rel (0) target = $region113
  $region112: #{lstm_forward.1} parent=0 // pred_region
    _
  $region113: #{lstm_forward.1} parent=0 // pred_fallthru
    _
  %2204 = vsyncmov [#allocation4]
  %s2205 = vpop.sfrf %2204
  %p2206 = scmp.eq.s32.totalorder %s2205, 0
  %p2207 = pneg %p2206
  %2209 = shalt.err (%p2207)
  %s2210 = scalar_lea.sflag [#allocation4], 1
  %2211 = vsyncmov %s2210
  %s2212 = vpop.sfrf %2211
  %p2213 = scmp.eq.s32.totalorder %s2212, 0
  %p2214 = pneg %p2213
  %2216 = shalt.err (%p2214)

</llo_original>
